<compile_context>
chip_gen: v7x
topology: tpu7x:2x2x1
jax: 0.10.0
libtpu: 0.0.40
codegen_flags: <defaults>
</compile_context>

<pallas_src>
import math
from functools import partial

import jax
import jax.numpy as jnp
from jax.experimental import pallas as pl
from jax.experimental.pallas import tpu as pltpu


# ---------------------------------------------------------------------------
# In-kernel helpers (pure jnp, traced inside the Pallas kernels)
# ---------------------------------------------------------------------------

def _layer_norm(x, gamma, beta, eps=1e-5):
    """LayerNorm over the channel (lane) axis, two-pass variance, f32."""
    mu = jnp.mean(x, axis=-1, keepdims=True)
    xc = x - mu
    var = jnp.mean(xc * xc, axis=-1, keepdims=True)
    return xc * jax.lax.rsqrt(var + eps) * gamma + beta


def _mha_wo_folded(q, k, v, wo, bo, *, heads):
    """Multi-head attention with the output projection folded per head.

    q: (L, C) f32  (q-scale already folded into the Q projection weights)
    k, v: (S, C) f32, wo: (C, C) bf16, bo: (1, C) f32.
    Returns softmax(q k^T) v @ wo + bo as (L, C) f32 without any per-head
    concatenate / 16-lane stores: each head contributes P_h @ (V_h @ Wo_h),
    a lane-dense (N = C) MXU matmul, accumulated in f32.
    """
    L, C = q.shape
    hd = C // heads
    acc = None
    for n in range(heads):                               # short fixed loop, unrolled
        lo = n * hd
        qn = q[:, lo:lo + hd].astype(jnp.bfloat16)
        kn = k[:, lo:lo + hd].astype(jnp.bfloat16)
        vn = v[:, lo:lo + hd].astype(jnp.bfloat16)
        # scores = q_h @ k_h^T  (contract last dims => trans_b on the MXU)
        s = jax.lax.dot_general(qn, kn, (((1,), (1,)), ((), ())),
                                preferred_element_type=jnp.float32)
        s = s - jnp.max(s, axis=-1, keepdims=True)
        p = jnp.exp(s)                                    # f32 exp (safe on v5e too)
        p = p * pl.reciprocal(jnp.sum(p, axis=-1, keepdims=True), approx=True)
        # fold Wo_h into the value path:  (S, hd) @ (hd, C) -> (S, C)
        vwo = jnp.dot(vn, wo[lo:lo + hd, :], preferred_element_type=jnp.float32)
        # lane-dense PV:  (L, S) @ (S, C) -> (L, C)
        h_out = jnp.dot(p.astype(jnp.bfloat16), vwo.astype(jnp.bfloat16),
                        preferred_element_type=jnp.float32)
        acc = h_out if acc is None else acc + h_out
    return acc + bo


# ---------------------------------------------------------------------------
# Kernel 1: GroupNorm(32) + proj_in (1x1 conv) + NCHW -> (HW, C) tokens
# ---------------------------------------------------------------------------

def _gn_proj_in_kernel(x_ref, gmat_ref, g_ref, b_ref, w_ref, wb_ref, o_ref, *, eps):
    x = x_ref[0]                                          # (C, HW) channel-major, f32
    gmat = gmat_ref[...]                                  # (C, C) block-diag group average
    # Two-pass group statistics: group mean, then variance of the centered data.
    # TODO(synk): replace the tiny N=1 gmat matvecs with a reshape-based group reduction.
    mu_c = jnp.mean(x, axis=1, keepdims=True)             # (C, 1) per-channel spatial mean
    mu_g = jnp.dot(gmat, mu_c, preferred_element_type=jnp.float32)
    xc = x - mu_g
    var_c = jnp.mean(xc * xc, axis=1, keepdims=True)
    var_g = jnp.dot(gmat, var_c, preferred_element_type=jnp.float32)
    y = xc * jax.lax.rsqrt(var_g + eps) * g_ref[...] + b_ref[...]
    # 1x1 conv (proj_in) fused with the NCHW -> token layout change (bf16 MXU, f32 acc):
    #   tok[l, co] = sum_ci y[ci, l] * w[ci, co]   (transposed-LHS contraction)
    tok = jax.lax.dot_general(y.astype(jnp.bfloat16), w_ref[...],
                              (((0,), (0,)), ((), ())),
                              preferred_element_type=jnp.float32)        # (HW, C)
    o_ref[0] = (tok + wb_ref[...]).astype(o_ref.dtype)


def gn_proj_in(x_cm, gmat, gn_g, gn_b, w_in, b_in):
    """x_cm: (B, C, HW) channel-major -> tokens (B, HW, C)."""
    B, C, HW = x_cm.shape
    flops = 2 * B * HW * C * C + 4 * B * C * C
    bytes_accessed = int(2 * B * HW * C * 4 + C * C * 4 + C * C * 2)
    return pl.pallas_call(
        partial(_gn_proj_in_kernel, eps=1e-5),
        out_shape=jax.ShapeDtypeStruct((B, HW, C), jnp.float32),
        grid=(B,),
        in_specs=[
            pl.BlockSpec((1, C, HW), lambda b: (b, 0, 0)),
            pl.BlockSpec((C, C), lambda b: (0, 0)),
            pl.BlockSpec((C, 1), lambda b: (0, 0)),
            pl.BlockSpec((C, 1), lambda b: (0, 0)),
            pl.BlockSpec((C, C), lambda b: (0, 0)),
            pl.BlockSpec((1, C), lambda b: (0, 0)),
        ],
        out_specs=pl.BlockSpec((1, HW, C), lambda b: (b, 0, 0)),
        compiler_params=pltpu.CompilerParams(dimension_semantics=("parallel",)),
        cost_estimate=pl.CostEstimate(flops=int(flops), transcendentals=int(B * C),
                                      bytes_accessed=bytes_accessed),
    )(x_cm, gmat, gn_g, gn_b, w_in, b_in)


# ---------------------------------------------------------------------------
# Kernel 2: ALL BasicTransformer layers fused into one pallas_call
#           grid = (B, layers); the token activation is carried in the output
#           VMEM block across the layer axis, weights indexed by the layer axis.
# ---------------------------------------------------------------------------

def _transformer_stack_kernel(
        x_ref, cond_ref,
        ln1_g_ref, ln1_b_ref, wqkv1_ref, bqkv1_ref, wo1_ref, bo1_ref,
        ln2_g_ref, ln2_b_ref, wq2_ref, bq2_ref, wkv2_ref, bkv2_ref, wo2_ref, bo2_ref,
        ln3_g_ref, ln3_b_ref, wf1_ref, bf1_ref, wf2_ref, bf2_ref,
        o_ref, *, heads):
    # Initialize the resident carry with the input tokens on the first layer.
    @pl.when(pl.program_id(1) == 0)
    def _():
        o_ref[...] = x_ref[...]

    C = o_ref.shape[-1]
    x = o_ref[0]                                          # (L, C) f32 carry
    cond = cond_ref[0]                                    # (S, Dc) f32

    # ---- x = attn1(LN1(x)) + x  (self-attention; reference passes cond = x) ----
    h = _layer_norm(x, ln1_g_ref[0], ln1_b_ref[0]).astype(jnp.bfloat16)
    qkv = jnp.dot(h, wqkv1_ref[0],
                  preferred_element_type=jnp.float32) + bqkv1_ref[0]     # (L, 3C)
    q, k, v = qkv[:, :C], qkv[:, C:2 * C], qkv[:, 2 * C:]
    x = x + _mha_wo_folded(q, k, v, wo1_ref[0], bo1_ref[0], heads=heads)

    # ---- x = attn2(LN2(x), cond) + x  (cross-attention) ----
    h = _layer_norm(x, ln2_g_ref[0], ln2_b_ref[0]).astype(jnp.bfloat16)
    q = jnp.dot(h, wq2_ref[0],
                preferred_element_type=jnp.float32) + bq2_ref[0]         # (L, C)
    kv = jnp.dot(cond.astype(jnp.bfloat16), wkv2_ref[0],
                 preferred_element_type=jnp.float32) + bkv2_ref[0]       # (S, 2C)
    k, v = kv[:, :C], kv[:, C:]
    x = x + _mha_wo_folded(q, k, v, wo2_ref[0], bo2_ref[0], heads=heads)

    # ---- x = ffn(LN3(x)) + x ----
    # Reference ffn is Linear -> Dropout(eval: identity) -> Linear, NO nonlinearity
    # (kept literally to match the spec).
    h = _layer_norm(x, ln3_g_ref[0], ln3_b_ref[0]).astype(jnp.bfloat16)
    f = jnp.dot(h, wf1_ref[0],
                preferred_element_type=jnp.float32) + bf1_ref[0]         # (L, 4C)
    x = x + jnp.dot(f.astype(jnp.bfloat16), wf2_ref[0],
                    preferred_element_type=jnp.float32) + bf2_ref[0]

    o_ref[0] = x.astype(o_ref.dtype)


_STACK_WEIGHT_NAMES = (
    "ln1_g", "ln1_b", "wqkv1", "bqkv1", "wo1", "bo1",
    "ln2_g", "ln2_b", "wq2", "bq2", "wkv2", "bkv2", "wo2", "bo2",
    "ln3_g", "ln3_b", "wf1", "bf1", "wf2", "bf2",
)


def transformer_stack(x_tok, cond, stack, *, heads):
    """x_tok: (B, L, C), cond: (B, S, Dc), stack: per-name weights stacked on a leading
    `layers` axis.  All layers run inside a single pallas_call."""
    B, L, C = x_tok.shape
    S, Dc = cond.shape[1], cond.shape[2]
    layers = stack["wqkv1"].shape[0]
    weights = [stack[name] for name in _STACK_WEIGHT_NAMES]

    per_step = (2 * L * C * 3 * C                                     # fused QKV
                + 2 * L * L * C + 2 * L * C * C + 2 * heads * L * L * C   # self-attn
                + 2 * L * C * C + 2 * S * Dc * 2 * C                      # cross q / kv
                + 2 * L * S * C + 2 * S * C * C + 2 * heads * L * S * C   # cross attn
                + 2 * 2 * L * C * 4 * C)                                  # FFN
    flops = B * layers * per_step
    transcendentals = B * layers * heads * (L * L + L * S)
    weight_bytes_per_layer = sum(int(w.size // layers) * w.dtype.itemsize for w in weights)
    bytes_accessed = (2 * B * L * C * 4 + B * S * Dc * 4
                      + B * layers * weight_bytes_per_layer)

    in_specs = [
        pl.BlockSpec((1, L, C), lambda b, l: (b, 0, 0)),      # tokens: resident per b
        pl.BlockSpec((1, S, Dc), lambda b, l: (b, 0, 0)),     # cond: resident per b
    ] + [pl.BlockSpec((1,) + w.shape[1:], lambda b, l: (l, 0, 0)) for w in weights]

    return pl.pallas_call(
        partial(_transformer_stack_kernel, heads=heads),
        out_shape=jax.ShapeDtypeStruct((B, L, C), jnp.float32),
        grid=(B, layers),
        in_specs=in_specs,
        out_specs=pl.BlockSpec((1, L, C), lambda b, l: (b, 0, 0)),  # carried across l
        compiler_params=pltpu.CompilerParams(
            dimension_semantics=("parallel", "arbitrary"),
            # Explicit budget: small shapes here; re-derive when L-tiling for v7x (64 MiB).
            vmem_limit_bytes=32 * 1024 * 1024),
        cost_estimate=pl.CostEstimate(flops=int(flops),
                                      transcendentals=int(transcendentals),
                                      bytes_accessed=int(bytes_accessed)),
    )(x_tok, cond, *weights)


# ---------------------------------------------------------------------------
# Kernel 3: (HW, C) tokens -> NCHW + proj_out (1x1 conv) + residual add
# ---------------------------------------------------------------------------

def _proj_out_kernel(tok_ref, xin_ref, w_ref, b_ref, o_ref):
    tok = tok_ref[0].astype(jnp.bfloat16)                 # (HW, C)
    # out[co, l] = sum_c w[co, c] * tok[l, c]  (1x1 conv + layout change, trans_b; bf16 MXU)
    y = jax.lax.dot_general(w_ref[...], tok, (((1,), (1,)), ((), ())),
                            preferred_element_type=jnp.float32)          # (C, HW)
    o_ref[0] = (y + b_ref[...] + xin_ref[0]).astype(o_ref.dtype)


def proj_out_residual(tok, x_in_cm, w_out, b_out):
    """tok: (B, HW, C), x_in_cm: (B, C, HW) -> (B, C, HW)."""
    B, L, C = tok.shape
    HW = x_in_cm.shape[2]
    return pl.pallas_call(
        _proj_out_kernel,
        out_shape=jax.ShapeDtypeStruct((B, C, HW), jnp.float32),
        grid=(B,),
        in_specs=[
            pl.BlockSpec((1, L, C), lambda b: (b, 0, 0)),
            pl.BlockSpec((1, C, HW), lambda b: (b, 0, 0)),
            pl.BlockSpec((C, C), lambda b: (0, 0)),
            pl.BlockSpec((C, 1), lambda b: (0, 0)),
        ],
        out_specs=pl.BlockSpec((1, C, HW), lambda b: (b, 0, 0)),
        compiler_params=pltpu.CompilerParams(dimension_semantics=("parallel",)),
        cost_estimate=pl.CostEstimate(flops=int(2 * B * L * C * C), transcendentals=0,
                                      bytes_accessed=int(3 * B * L * C * 4 + C * C * 2)),
    )(tok, x_in_cm, w_out, b_out)


# ---------------------------------------------------------------------------
# Parameters + module wrapper
# ---------------------------------------------------------------------------

def init_params(key, *, channels, d_cond, layers, heads, groups=32):
    C, Dc = channels, d_cond
    # NOTE: reference multiplies q by (attn_dim / n_heads) ** 0.5 — kept literally and
    # folded into the Q projection weights (f32, before the bf16 cast).  Q biases are
    # zero here; non-zero Q biases would be scaled identically.
    scale = math.sqrt(C / heads)

    def w(k, shape, s=0.05):
        return s * jax.random.normal(k, shape, dtype=jnp.float32)

    zeros = lambda *s: jnp.zeros(s, jnp.float32)
    ones = lambda *s: jnp.ones(s, jnp.float32)
    cg = C // groups

    keys = jax.random.split(key, 9)

    wqkv1 = w(keys[0], (layers, C, 3 * C))
    wqkv1 = wqkv1.at[:, :, :C].multiply(scale)            # fold q-scale (self-attn)
    wq2 = w(keys[2], (layers, C, C)) * scale              # fold q-scale (cross-attn)

    return {
        # block-diagonal group-averaging matrix for GroupNorm statistics
        "gmat": jnp.kron(jnp.eye(groups, dtype=jnp.float32),
                         jnp.ones((cg, cg), jnp.float32) / cg),
        "gn_g": ones(C, 1), "gn_b": zeros(C, 1),
        # TODO(synk): reference `nn.Conv2d(channels, channels)` omits kernel_size;
        # implemented as the standard SpatialTransformer 1x1 projection.
        "w_in": w(keys[7], (C, C)).astype(jnp.bfloat16),   # stored (C_in, C_out), bf16
        "b_in": zeros(1, C),
        "w_out": w(keys[8], (C, C)).astype(jnp.bfloat16),  # stored (C_out, C_in), bf16
        "b_out": zeros(C, 1),
        # Per-layer weights stacked along a leading `layers` axis (for the fused K2 call).
        "stack": {
            "ln1_g": ones(layers, 1, C), "ln1_b": zeros(layers, 1, C),
            "wqkv1": wqkv1.astype(jnp.bfloat16), "bqkv1": zeros(layers, 1, 3 * C),
            "wo1": w(keys[1], (layers, C, C)).astype(jnp.bfloat16),
            "bo1": zeros(layers, 1, C),
            "ln2_g": ones(layers, 1, C), "ln2_b": zeros(layers, 1, C),
            "wq2": wq2.astype(jnp.bfloat16), "bq2": zeros(layers, 1, C),
            "wkv2": w(keys[3], (layers, Dc, 2 * C)).astype(jnp.bfloat16),
            "bkv2": zeros(layers, 1, 2 * C),
            "wo2": w(keys[4], (layers, C, C)).astype(jnp.bfloat16),
            "bo2": zeros(layers, 1, C),
            "ln3_g": ones(layers, 1, C), "ln3_b": zeros(layers, 1, C),
            "wf1": w(keys[5], (layers, C, 4 * C)).astype(jnp.bfloat16),
            "bf1": zeros(layers, 1, 4 * C),
            "wf2": w(keys[6], (layers, 4 * C, C)).astype(jnp.bfloat16),
            "bf2": zeros(layers, 1, C),
        },
    }


class SpatialTransformer:
    """Pallas-TPU forward of the reference SpatialTransformer (inference)."""

    def __init__(self, params, *, n_heads):
        self.p = params
        self.heads = n_heads

    def __call__(self, x, cond):
        p = self.p
        B, C, H, W = x.shape
        x_cm = x.reshape(B, C, H * W).astype(jnp.float32)            # free reshape (NCHW)
        tok = gn_proj_in(x_cm, p["gmat"], p["gn_g"], p["gn_b"],
                         p["w_in"], p["b_in"])                        # (B, HW, C)
        tok = transformer_stack(tok, cond.astype(jnp.float32), p["stack"],
                                heads=self.heads)                     # all layers, one call
        out = proj_out_residual(tok, x_cm, p["w_out"], p["b_out"])    # (B, C, HW)
        return out.reshape(B, C, H, W)


if __name__ == "__main__":
    key = jax.random.PRNGKey(0)
    kp, kx, kc = jax.random.split(key, 3)

    # GroupNorm(num_groups=32) requires channels % 32 == 0; channels = 128 also keeps
    # every matmul output lane-dense.  The reference's attn1 feeds x (dim = channels)
    # through its d_cond-sized k/v projections, so d_cond == channels here.
    B, C, H, W = 2, 128, 16, 16
    S = 8
    d_cond = C
    n_heads, layers = 8, 2

    params = init_params(kp, channels=C, d_cond=d_cond, layers=layers, heads=n_heads)
    model = SpatialTransformer(params, n_heads=n_heads)

    x = jax.random.normal(kx, (B, C, H, W), dtype=jnp.float32)
    cond = jax.random.normal(kc, (B, S, d_cond), dtype=jnp.float32)

    out = model(x, cond)
    jax.block_until_ready(out)
    assert out.shape == (B, C, H, W) and out.dtype == jnp.float32
    print("KERNEL_OK")
</pallas_src>

<mosaic_0001>
module attributes {stable_mosaic.version = 11 : i64} {
  func.func @_gn_proj_in_kernel(%arg0: i32, %arg1: memref<1x128x256xf32, #tpu.memory_space<vmem>>, %arg2: memref<128x128xf32, #tpu.memory_space<vmem>>, %arg3: memref<128x1xf32, #tpu.memory_space<vmem>>, %arg4: memref<128x1xf32, #tpu.memory_space<vmem>>, %arg5: memref<128x128xbf16, #tpu.memory_space<vmem>>, %arg6: memref<1x128xf32, #tpu.memory_space<vmem>>, %arg7: memref<1x256x128xf32, #tpu.memory_space<vmem>>) attributes {dimension_semantics = [#tpu.dimension_semantics<parallel>], iteration_bounds = array<i64: 2>, scalar_prefetch = 0 : i64, scratch_operands = 0 : i64, tpu.core_type = #tpu.core_type<tc>, window_params = [{transform_indices = @transform_0, window_bounds = array<i64: 1, 128, 256>}, {pipeline_mode = #tpu.pipeline_mode<synchronous>, transform_indices = @transform_1, window_bounds = array<i64: 128, 128>}, {pipeline_mode = #tpu.pipeline_mode<synchronous>, transform_indices = @transform_2, window_bounds = array<i64: 128, 1>}, {pipeline_mode = #tpu.pipeline_mode<synchronous>, transform_indices = @transform_3, window_bounds = array<i64: 128, 1>}, {pipeline_mode = #tpu.pipeline_mode<synchronous>, transform_indices = @transform_4, window_bounds = array<i64: 128, 128>}, {pipeline_mode = #tpu.pipeline_mode<synchronous>, transform_indices = @transform_5, window_bounds = array<i64: 1, 128>}, {transform_indices = @transform_6, window_bounds = array<i64: 1, 256, 128>}]} {
    %c0 = arith.constant 0 : index
    %c0_0 = arith.constant 0 : index
    %c0_1 = arith.constant 0 : index
    %0 = vector.load %arg1[%c0, %c0_0, %c0_1] : memref<1x128x256xf32, #tpu.memory_space<vmem>>, vector<1x128x256xf32>
    %1 = vector.shape_cast %0 : vector<1x128x256xf32> to vector<128x256xf32>
    %c0_2 = arith.constant 0 : index
    %c0_3 = arith.constant 0 : index
    %2 = vector.load %arg2[%c0_2, %c0_3] : memref<128x128xf32, #tpu.memory_space<vmem>>, vector<128x128xf32>
    %cst = arith.constant dense<0.000000e+00> : vector<128xf32>
    %3 = vector.multi_reduction <add>, %1, %cst [1] : vector<128x256xf32> to vector<128xf32>
    %4 = vector.shape_cast %3 : vector<128xf32> to vector<128x1xf32>
    %cst_4 = arith.constant 2.560000e+02 : f32
    %5 = vector.broadcast %cst_4 : f32 to vector<128x1xf32>
    %6 = arith.divf %4, %5 : vector<128x1xf32>
    %cst_5 = arith.constant dense<0.000000e+00> : vector<128x1xf32>
    %7 = tpu.matmul %2, %6, %cst_5 {dimension_numbers = #tpu.dot_dimension_numbers<[1], [0], [0], [1], [0, 0, 1, 1], [], []>} : vector<128x128xf32>, vector<128x1xf32>, vector<128x1xf32> -> vector<128x1xf32>
    %8 = vector.broadcast %7 : vector<128x1xf32> to vector<128x256xf32>
    %9 = arith.subf %1, %8 : vector<128x256xf32>
    %10 = arith.mulf %9, %9 : vector<128x256xf32>
    %cst_6 = arith.constant dense<0.000000e+00> : vector<128xf32>
    %11 = vector.multi_reduction <add>, %10, %cst_6 [1] : vector<128x256xf32> to vector<128xf32>
    %12 = vector.shape_cast %11 : vector<128xf32> to vector<128x1xf32>
    %cst_7 = arith.constant 2.560000e+02 : f32
    %13 = vector.broadcast %cst_7 : f32 to vector<128x1xf32>
    %14 = arith.divf %12, %13 : vector<128x1xf32>
    %cst_8 = arith.constant dense<0.000000e+00> : vector<128x1xf32>
    %15 = tpu.matmul %2, %14, %cst_8 {dimension_numbers = #tpu.dot_dimension_numbers<[1], [0], [0], [1], [0, 0, 1, 1], [], []>} : vector<128x128xf32>, vector<128x1xf32>, vector<128x1xf32> -> vector<128x1xf32>
    %cst_9 = arith.constant 9.99999974E-6 : f32
    %16 = vector.broadcast %cst_9 : f32 to vector<128x1xf32>
    %17 = arith.addf %15, %16 : vector<128x1xf32>
    %18 = math.rsqrt %17 : vector<128x1xf32>
    %19 = vector.broadcast %18 : vector<128x1xf32> to vector<128x256xf32>
    %20 = arith.mulf %9, %19 : vector<128x256xf32>
    %c0_10 = arith.constant 0 : index
    %c0_11 = arith.constant 0 : index
    %21 = vector.load %arg3[%c0_10, %c0_11] : memref<128x1xf32, #tpu.memory_space<vmem>>, vector<128x1xf32>
    %22 = vector.broadcast %21 : vector<128x1xf32> to vector<128x256xf32>
    %23 = arith.mulf %20, %22 : vector<128x256xf32>
    %c0_12 = arith.constant 0 : index
    %c0_13 = arith.constant 0 : index
    %24 = vector.load %arg4[%c0_12, %c0_13] : memref<128x1xf32, #tpu.memory_space<vmem>>, vector<128x1xf32>
    %25 = vector.broadcast %24 : vector<128x1xf32> to vector<128x256xf32>
    %26 = arith.addf %23, %25 : vector<128x256xf32>
    %27 = arith.truncf %26 : vector<128x256xf32> to vector<128x256xbf16>
    %c0_14 = arith.constant 0 : index
    %c0_15 = arith.constant 0 : index
    %28 = vector.load %arg5[%c0_14, %c0_15] : memref<128x128xbf16, #tpu.memory_space<vmem>>, vector<128x128xbf16>
    %cst_16 = arith.constant dense<0.000000e+00> : vector<256x128xf32>
    %29 = tpu.matmul %27, %28, %cst_16 {dimension_numbers = #tpu.dot_dimension_numbers<[0], [0], [1], [1], [0, 1, 1, 1], [], []>} : vector<128x256xbf16>, vector<128x128xbf16>, vector<256x128xf32> -> vector<256x128xf32>
    %c0_17 = arith.constant 0 : index
    %c0_18 = arith.constant 0 : index
    %30 = vector.load %arg6[%c0_17, %c0_18] : memref<1x128xf32, #tpu.memory_space<vmem>>, vector<1x128xf32>
    %31 = vector.broadcast %30 : vector<1x128xf32> to vector<256x128xf32>
    %32 = arith.addf %29, %31 : vector<256x128xf32>
    %c0_19 = arith.constant 0 : index
    %c0_20 = arith.constant 0 : index
    %c0_21 = arith.constant 0 : index
    %33 = vector.load %arg7[%c0_19, %c0_20, %c0_21] : memref<1x256x128xf32, #tpu.memory_space<vmem>>, vector<1x256x128xf32>
    %34 = vector.shape_cast %33 : vector<1x256x128xf32> to vector<256x128xf32>
    %35 = vector.shape_cast %32 : vector<256x128xf32> to vector<1x256x128xf32>
    tpu.vector_store %arg7[%c0_19, %c0_20, %c0_21], %35 {strides = array<i32>} : memref<1x256x128xf32, #tpu.memory_space<vmem>>, vector<1x256x128xf32>,
    return
  }
  func.func @transform_0(%arg0: i32) -> (i32, i32, i32) {
    %c0_i32 = arith.constant 0 : i32
    %c0_i32_0 = arith.constant 0 : i32
    %c0_i32_1 = arith.constant 0 : i32
    return %arg0, %c0_i32, %c0_i32_0 : i32, i32, i32
  }
  func.func @transform_1(%arg0: i32) -> (i32, i32) {
    %c0_i32 = arith.constant 0 : i32
    %c0_i32_0 = arith.constant 0 : i32
    %c0_i32_1 = arith.constant 0 : i32
    return %c0_i32, %c0_i32_0 : i32, i32
  }
  func.func @transform_2(%arg0: i32) -> (i32, i32) {
    %c0_i32 = arith.constant 0 : i32
    %c0_i32_0 = arith.constant 0 : i32
    %c0_i32_1 = arith.constant 0 : i32
    return %c0_i32, %c0_i32_0 : i32, i32
  }
  func.func @transform_3(%arg0: i32) -> (i32, i32) {
    %c0_i32 = arith.constant 0 : i32
    %c0_i32_0 = arith.constant 0 : i32
    %c0_i32_1 = arith.constant 0 : i32
    return %c0_i32, %c0_i32_0 : i32, i32
  }
  func.func @transform_4(%arg0: i32) -> (i32, i32) {
    %c0_i32 = arith.constant 0 : i32
    %c0_i32_0 = arith.constant 0 : i32
    %c0_i32_1 = arith.constant 0 : i32
    return %c0_i32, %c0_i32_0 : i32, i32
  }
  func.func @transform_5(%arg0: i32) -> (i32, i32) {
    %c0_i32 = arith.constant 0 : i32
    %c0_i32_0 = arith.constant 0 : i32
    %c0_i32_1 = arith.constant 0 : i32
    return %c0_i32, %c0_i32_0 : i32, i32
  }
  func.func @transform_6(%arg0: i32) -> (i32, i32, i32) {
    %c0_i32 = arith.constant 0 : i32
    %c0_i32_0 = arith.constant 0 : i32
    %c0_i32_1 = arith.constant 0 : i32
    return %arg0, %c0_i32, %c0_i32_0 : i32, i32, i32
  }
}

</mosaic_0001>

<llo_original>
// kernel: tpu_custom_call.1
$region0: #{tpu_custom_call.1}
  #allocation0 [shape = 'u32[]', space=smem, size = 0x4, offset = 0x4, fixed_abs, tag = 'smem constant byte address 0x4 - core index']
  #allocation1 [shape = 'u32[144,128]{1,0:T(1,128)}', space=vmem, size = 0x12000, scoped, tag = 'internal scratch']
  %s0 = inlined_call_operand.hbm [shape: f32[2,128,256], index: 0, kind: input, shape index: {}]
  %s1 = inlined_call_operand.vmem [shape: f32[128,128], index: 1, kind: input, shape index: {}]
  %s2 = inlined_call_operand.vmem [shape: f32[128,1], index: 2, kind: input, shape index: {}]
  %s3 = inlined_call_operand.vmem [shape: f32[128,1], index: 3, kind: input, shape index: {}]
  %s4 = inlined_call_operand.vmem [shape: bf16[128,128], index: 4, kind: input, shape index: {}]
  %s5 = inlined_call_operand.vmem [shape: f32[1,128], index: 5, kind: input, shape index: {}]
  %s6 = inlined_call_operand.hbm [shape: f32[2,256,128], index: 6, kind: output, shape index: {}]
  %s7 = sld [smem:[#allocation0]]
  $region61: #{tpu_custom_call.1} parent=0
    _
  %s9 = ssub.s32 1, %s7
  %s10 = scalar_select 0, %s9, %s7
  $region1: #{tpu_custom_call.1} parent=0
    #allocation2 [shape = 'u8[262144]{0}', space=vmem, size = 0x40000, scoped, tag = 'input window, operand 0']
    #allocation3 [shape = 's32[2]{0}', space=sflag, size = 0x8, scoped, tag = 'scoped memory for tpu_custom_call.1']
    #allocation4 [shape = 's32[2]{0}', space=sflag, size = 0x8, scoped, tag = 'scoped memory for tpu_custom_call.1']
    #allocation5 [shape = 'u8[262144]{0}', space=vmem, size = 0x40000, scoped, tag = 'output window, operand 0']
    %11 = vsyncpa [#allocation3], 0
    %s12 = scalar_lea.sflag [#allocation3], 1
    %13 = vsyncpa %s12, 0
    %14 = vsyncpa [#allocation4], 0
    %s15 = scalar_lea.sflag [#allocation4], 1
    %16 = vsyncpa %s15, 0
    loop: start=0, step=1, limit=4
    $region2: #{tpu_custom_call.1} parent=1 // loop_pre_header
      _
    $region3: #{tpu_custom_call.1} parent=1 // loop_header
      %s18 = sphi 0, %s22
      %p19 = scmp.ge.s32.totalorder %s18, 4
      %s28 = sphi 0, %s30
      %s31 = sphi 0, %s28
      %s32 = sphi 0, %s31
      %s48 = sphi 0, %s32
      %s52 = sphi 0, %s52
      %s54 = sphi 0, %s52
      %s55 = sphi 0, %s54
      %s69 = sphi 0, %s55
      %s73 = sphi 0, %s73
      %s75 = sphi 0, %s73
      %s76 = sphi 0, %s75
      %s90 = sphi 0, %s76
      %s94 = sphi 0, %s94
      %s96 = sphi 0, %s94
      %s97 = sphi 0, %s96
      %s111 = sphi 0, %s97
      %s115 = sphi 0, %s115
      %s117 = sphi 0, %s115
      %s118 = sphi 0, %s117
      %s132 = sphi 0, %s118
      %s136 = sphi 0, %s136
      %s138 = sphi 0, %s136
      %s139 = sphi 0, %s138
      %s153 = sphi 0, %s139
      %s159 = sphi 0, %s161
      %s162 = sphi 0, %s159
      %s163 = sphi 0, %s162
      %s179 = sphi 0, %s163
    $region4: #{tpu_custom_call.1} parent=1 // loop_header_branch
      %21 = sbr.rel (%p19) target = $region8
    $region5: #{tpu_custom_call.1} parent=1 // loop_body
      %s23 = ssub.s32 %s18, 1
      %s24 = ssub.s32 %s18, 2
      %s25 = sadd.s32 %s18, 1
      %s26 = ssub.s32 %s18, %s25
      %p27 = scmp.eq.s32.totalorder %s26, 0
      %s29 = sadd.s32 %s28, 1
      %s30 = scalar_select %p27, %s28, %s29
      %p33 = pneg %p27
      %p34 = scmp.eq.s32.totalorder %s18, 1
      %p35 = por %p33, %p34
      %p36 = scmp.ne.s32.totalorder %s28, %s31
      %p37 = scmp.eq.s32.totalorder %s18, 0
      %p38 = por %p36, %p37
      %p39 = scmp.ne.s32.totalorder %s28, %s31
      %p40 = scmp.eq.s32.totalorder %s23, 1
      %p41 = por %p39, %p40
      %p42 = scmp.ne.s32.totalorder %s31, %s32
      %p43 = scmp.eq.s32.totalorder %s23, 0
      %p44 = por %p42, %p43
      %p45 = scmp.ne.s32.totalorder %s31, %s32
      %p46 = scmp.eq.s32.totalorder %s24, 1
      %p47 = por %p45, %p46
      %p49 = scmp.ne.s32.totalorder %s32, %s48
      %p50 = scmp.eq.s32.totalorder %s24, 0
      %p51 = por %p49, %p50
      %s53 = sadd.s32 %s52, 1
      %p56 = scmp.eq.s32.totalorder %s18, 1
      %p57 = scmp.ne.s32.totalorder %s52, %s54
      %p58 = scmp.eq.s32.totalorder %s18, 0
      %p59 = por %p57, %p58
      %p60 = scmp.ne.s32.totalorder %s52, %s54
      %p61 = scmp.eq.s32.totalorder %s23, 1
      %p62 = por %p60, %p61
      %p63 = scmp.ne.s32.totalorder %s54, %s55
      %p64 = scmp.eq.s32.totalorder %s23, 0
      %p65 = por %p63, %p64
      %p66 = scmp.ne.s32.totalorder %s54, %s55
      %p67 = scmp.eq.s32.totalorder %s24, 1
      %p68 = por %p66, %p67
      %p70 = scmp.ne.s32.totalorder %s55, %s69
      %p71 = scmp.eq.s32.totalorder %s24, 0
      %p72 = por %p70, %p71
      %s74 = sadd.s32 %s73, 1
      %p77 = scmp.eq.s32.totalorder %s18, 1
      %p78 = scmp.ne.s32.totalorder %s73, %s75
      %p79 = scmp.eq.s32.totalorder %s18, 0
      %p80 = por %p78, %p79
      %p81 = scmp.ne.s32.totalorder %s73, %s75
      %p82 = scmp.eq.s32.totalorder %s23, 1
      %p83 = por %p81, %p82
      %p84 = scmp.ne.s32.totalorder %s75, %s76
      %p85 = scmp.eq.s32.totalorder %s23, 0
      %p86 = por %p84, %p85
      %p87 = scmp.ne.s32.totalorder %s75, %s76
      %p88 = scmp.eq.s32.totalorder %s24, 1
      %p89 = por %p87, %p88
      %p91 = scmp.ne.s32.totalorder %s76, %s90
      %p92 = scmp.eq.s32.totalorder %s24, 0
      %p93 = por %p91, %p92
      %s95 = sadd.s32 %s94, 1
      %p98 = scmp.eq.s32.totalorder %s18, 1
      %p99 = scmp.ne.s32.totalorder %s94, %s96
      %p100 = scmp.eq.s32.totalorder %s18, 0
      %p101 = por %p99, %p100
      %p102 = scmp.ne.s32.totalorder %s94, %s96
      %p103 = scmp.eq.s32.totalorder %s23, 1
      %p104 = por %p102, %p103
      %p105 = scmp.ne.s32.totalorder %s96, %s97
      %p106 = scmp.eq.s32.totalorder %s23, 0
      %p107 = por %p105, %p106
      %p108 = scmp.ne.s32.totalorder %s96, %s97
      %p109 = scmp.eq.s32.totalorder %s24, 1
      %p110 = por %p108, %p109
      %p112 = scmp.ne.s32.totalorder %s97, %s111
      %p113 = scmp.eq.s32.totalorder %s24, 0
      %p114 = por %p112, %p113
      %s116 = sadd.s32 %s115, 1
      %p119 = scmp.eq.s32.totalorder %s18, 1
      %p120 = scmp.ne.s32.totalorder %s115, %s117
      %p121 = scmp.eq.s32.totalorder %s18, 0
      %p122 = por %p120, %p121
      %p123 = scmp.ne.s32.totalorder %s115, %s117
      %p124 = scmp.eq.s32.totalorder %s23, 1
      %p125 = por %p123, %p124
      %p126 = scmp.ne.s32.totalorder %s117, %s118
      %p127 = scmp.eq.s32.totalorder %s23, 0
      %p128 = por %p126, %p127
      %p129 = scmp.ne.s32.totalorder %s117, %s118
      %p130 = scmp.eq.s32.totalorder %s24, 1
      %p131 = por %p129, %p130
      %p133 = scmp.ne.s32.totalorder %s118, %s132
      %p134 = scmp.eq.s32.totalorder %s24, 0
      %p135 = por %p133, %p134
      %s137 = sadd.s32 %s136, 1
      %p140 = scmp.eq.s32.totalorder %s18, 1
      %p141 = scmp.ne.s32.totalorder %s136, %s138
      %p142 = scmp.eq.s32.totalorder %s18, 0
      %p143 = por %p141, %p142
      %p144 = scmp.ne.s32.totalorder %s136, %s138
      %p145 = scmp.eq.s32.totalorder %s23, 1
      %p146 = por %p144, %p145
      %p147 = scmp.ne.s32.totalorder %s138, %s139
      %p148 = scmp.eq.s32.totalorder %s23, 0
      %p149 = por %p147, %p148
      %p150 = scmp.ne.s32.totalorder %s138, %s139
      %p151 = scmp.eq.s32.totalorder %s24, 1
      %p152 = por %p150, %p151
      %p154 = scmp.ne.s32.totalorder %s139, %s153
      %p155 = scmp.eq.s32.totalorder %s24, 0
      %p156 = por %p154, %p155
      %s157 = ssub.s32 %s18, %s25
      %p158 = scmp.eq.s32.totalorder %s157, 0
      %s160 = sadd.s32 %s159, 1
      %s161 = scalar_select %p158, %s159, %s160
      %p164 = pneg %p158
      %p165 = scmp.eq.s32.totalorder %s18, 1
      %p166 = por %p164, %p165
      %p167 = scmp.ne.s32.totalorder %s159, %s162
      %p168 = scmp.eq.s32.totalorder %s18, 0
      %p169 = por %p167, %p168
      %p170 = scmp.ne.s32.totalorder %s159, %s162
      %p171 = scmp.eq.s32.totalorder %s23, 1
      %p172 = por %p170, %p171
      %p173 = scmp.ne.s32.totalorder %s162, %s163
      %p174 = scmp.eq.s32.totalorder %s23, 0
      %p175 = por %p173, %p174
      %p176 = scmp.ne.s32.totalorder %s162, %s163
      %p177 = scmp.eq.s32.totalorder %s24, 1
      %p178 = por %p176, %p177
      %p180 = scmp.ne.s32.totalorder %s163, %s179
      %p181 = scmp.eq.s32.totalorder %s24, 0
      %p182 = por %p180, %p181
      %p183 = scmp.le.s32.totalorder 1, %s18
      %p184 = scmp.lt.s32.totalorder %s18, 3
      %p185 = pnand %p183, %p184
      %p186 = pneg %p185
      // Predicated region
      $region9: #{tpu_custom_call.1} parent=5 // pred_check
        _
      $region10: #{tpu_custom_call.1} parent=5 // pred_check_branch
        %188 = sbr.rel (%p185) target = $region12
      $region11: #{tpu_custom_call.1} parent=5 // pred_region
        %s189 = ssub.s32 %s18, 1
        // Predicated region
        $region13: #{tpu_custom_call.1} parent=11 // pred_check
          %p190 = pneg %p65
        $region14: #{tpu_custom_call.1} parent=11 // pred_check_branch
          %192 = sbr.rel (%p190) target = $region16
        $region15: #{tpu_custom_call.1} parent=11 // pred_region
          _
        $region16: #{tpu_custom_call.1} parent=11 // pred_fallthru
          _
        // Predicated region
        $region17: #{tpu_custom_call.1} parent=11 // pred_check
          %p193 = pneg %p86
        $region18: #{tpu_custom_call.1} parent=11 // pred_check_branch
          %195 = sbr.rel (%p193) target = $region20
        $region19: #{tpu_custom_call.1} parent=11 // pred_region
          _
        $region20: #{tpu_custom_call.1} parent=11 // pred_fallthru
          _
        // Predicated region
        $region21: #{tpu_custom_call.1} parent=11 // pred_check
          %p196 = pneg %p107
        $region22: #{tpu_custom_call.1} parent=11 // pred_check_branch
          %198 = sbr.rel (%p196) target = $region24
        $region23: #{tpu_custom_call.1} parent=11 // pred_region
          _
        $region24: #{tpu_custom_call.1} parent=11 // pred_fallthru
          _
        // Predicated region
        $region25: #{tpu_custom_call.1} parent=11 // pred_check
          %p199 = pneg %p128
        $region26: #{tpu_custom_call.1} parent=11 // pred_check_branch
          %201 = sbr.rel (%p199) target = $region28
        $region27: #{tpu_custom_call.1} parent=11 // pred_region
          _
        $region28: #{tpu_custom_call.1} parent=11 // pred_fallthru
          _
        // Predicated region
        $region29: #{tpu_custom_call.1} parent=11 // pred_check
          %p202 = pneg %p149
        $region30: #{tpu_custom_call.1} parent=11 // pred_check_branch
          %204 = sbr.rel (%p202) target = $region32
        $region31: #{tpu_custom_call.1} parent=11 // pred_region
          _
        $region32: #{tpu_custom_call.1} parent=11 // pred_fallthru
          _
      $region12: #{tpu_custom_call.1} parent=5 // pred_fallthru
        _
      %p205 = scmp.lt.s32.totalorder %s18, 2
      // Predicated region
      $region33: #{tpu_custom_call.1} parent=5 // pred_check
        %p206 = pneg %p205
      $region34: #{tpu_custom_call.1} parent=5 // pred_check_branch
        %208 = sbr.rel (%p206) target = $region36
      $region35: #{tpu_custom_call.1} parent=5 // pred_region
        // Predicated region
        $region37: #{tpu_custom_call.1} parent=35 // pred_check
          %p209 = pneg %p38
        $region38: #{tpu_custom_call.1} parent=35 // pred_check_branch
          %211 = sbr.rel (%p209) target = $region40
        $region39: #{tpu_custom_call.1} parent=35 // pred_region
          %s212 = sand.u32 %s28, 1
          %s213 = scalar_lea.sflag [#allocation3], %s212
          %s214 = sand.u32 %s28, 1
          %s215 = smul.addr %s214, 256
          %s216 = scalar_lea.vmem [#allocation2], %s215
          %s218 = ssub.s32 4096, 4096
          %219 = vsyncadd %s213, %s218
          %s220 = smul.addr %s18, 32
          %s221 = smul.addr %s220, 128
          %s222 = scalar_lea.hbm %s0, %s221
          %s223 = sshll.u32 %s216, 4
          %s224 = int_to_ptr.vmem [resolvable:$true] %s223
          %229 = dma.hbm_to_vmem [thread:$0]  %s222, 4096, %s224, %s213, 256, 256, 16
        $region40: #{tpu_custom_call.1} parent=35 // pred_fallthru
          _
      $region36: #{tpu_custom_call.1} parent=5 // pred_fallthru
        _
      %p230 = scmp.le.s32.totalorder 1, %s18
      %p231 = scmp.lt.s32.totalorder %s18, 3
      %p232 = pnand %p230, %p231
      %p233 = pneg %p232
      // Predicated region
      $region41: #{tpu_custom_call.1} parent=5 // pred_check
        _
      $region42: #{tpu_custom_call.1} parent=5 // pred_check_branch
        %235 = sbr.rel (%p232) target = $region44
      $region43: #{tpu_custom_call.1} parent=5 // pred_region
        %s236 = ssub.s32 %s18, 1
        %s237 = sand.u32 %s31, 1
        %s238 = scalar_lea.sflag [#allocation3], %s237
        %s239 = sand.u32 %s31, 1
        %s240 = smul.addr %s239, 256
        %s241 = scalar_lea.vmem [#allocation2], %s240
        // Predicated region
        $region45: #{tpu_custom_call.1} parent=43 // pred_check
          %p242 = pneg %p44
        $region46: #{tpu_custom_call.1} parent=43 // pred_check_branch
          %244 = sbr.rel (%p242) target = $region48
        $region47: #{tpu_custom_call.1} parent=43 // pred_region
          %245 = dma.done %s238, 4096
        $region48: #{tpu_custom_call.1} parent=43 // pred_fallthru
          _
        %s246 = sand.u32 %s31, 1
        %s247 = scalar_lea.sflag [#allocation3], %s246
        %s248 = sand.u32 %s31, 1
        %s249 = smul.addr %s248, 256
        %s250 = scalar_lea.vmem [#allocation2], %s249
        %p251 = pneg %p44
        %p252 = pneg %p41
        %p253 = pneg %p65
        %p254 = pneg %p62
        %p255 = pneg %p86
        %p256 = pneg %p83
        %p257 = pneg %p107
        %p258 = pneg %p104
        %p259 = pneg %p128
        %p260 = pneg %p125
        %p261 = pneg %p149
        %p262 = pneg %p146
        %p263 = pneg %p175
        %p264 = pneg %p172
        %s265 = sand.u32 %s162, 1
        %s266 = scalar_lea.sflag [#allocation4], %s265
        %s267 = sand.u32 %s162, 1
        %s268 = smul.addr %s267, 256
        %s269 = scalar_lea.vmem [#allocation5], %s268
        %v271 = vld [vmem:[%s241] sm:$0xff]
        %v272 = vld [vmem:[%s241 + $0x8] sm:$0xff]
        %v273 = vld [vmem:[%s241 + $0x10] sm:$0xff]
        %v274 = vld [vmem:[%s241 + $0x18] sm:$0xff]
        %v275 = vld [vmem:[%s241 + $0x20] sm:$0xff]
        %v276 = vld [vmem:[%s241 + $0x28] sm:$0xff]
        %v277 = vld [vmem:[%s241 + $0x30] sm:$0xff]
        %v278 = vld [vmem:[%s241 + $0x38] sm:$0xff]
        %v279 = vld [vmem:[%s241 + $0x40] sm:$0xff]
        %v280 = vld [vmem:[%s241 + $0x48] sm:$0xff]
        %v281 = vld [vmem:[%s241 + $0x50] sm:$0xff]
        %v282 = vld [vmem:[%s241 + $0x58] sm:$0xff]
        %v283 = vld [vmem:[%s241 + $0x60] sm:$0xff]
        %v284 = vld [vmem:[%s241 + $0x68] sm:$0xff]
        %v285 = vld [vmem:[%s241 + $0x70] sm:$0xff]
        %v286 = vld [vmem:[%s241 + $0x78] sm:$0xff]
        %v287 = vld [vmem:[%s241 + $0x80] sm:$0xff]
        %v288 = vld [vmem:[%s241 + $0x88] sm:$0xff]
        %v289 = vld [vmem:[%s241 + $0x90] sm:$0xff]
        %v290 = vld [vmem:[%s241 + $0x98] sm:$0xff]
        %v291 = vld [vmem:[%s241 + $0xa0] sm:$0xff]
        %v292 = vld [vmem:[%s241 + $0xa8] sm:$0xff]
        %v293 = vld [vmem:[%s241 + $0xb0] sm:$0xff]
        %v294 = vld [vmem:[%s241 + $0xb8] sm:$0xff]
        %v295 = vld [vmem:[%s241 + $0xc0] sm:$0xff]
        %v296 = vld [vmem:[%s241 + $0xc8] sm:$0xff]
        %v297 = vld [vmem:[%s241 + $0xd0] sm:$0xff]
        %v298 = vld [vmem:[%s241 + $0xd8] sm:$0xff]
        %v299 = vld [vmem:[%s241 + $0xe0] sm:$0xff]
        %v300 = vld [vmem:[%s241 + $0xe8] sm:$0xff]
        %v301 = vld [vmem:[%s241 + $0xf0] sm:$0xff]
        %v302 = vld [vmem:[%s241 + $0xf8] sm:$0xff]
        %v303 = vld [vmem:[%s1] sm:$0xff]
        %v304 = vld [vmem:[%s1 + $0x8] sm:$0xff]
        %v305 = vld [vmem:[%s1 + $0x10] sm:$0xff]
        %v306 = vld [vmem:[%s1 + $0x18] sm:$0xff]
        %v307 = vld [vmem:[%s1 + $0x20] sm:$0xff]
        %v308 = vld [vmem:[%s1 + $0x28] sm:$0xff]
        %v309 = vld [vmem:[%s1 + $0x30] sm:$0xff]
        %v310 = vld [vmem:[%s1 + $0x38] sm:$0xff]
        %v311 = vld [vmem:[%s1 + $0x40] sm:$0xff]
        %v312 = vld [vmem:[%s1 + $0x48] sm:$0xff]
        %v313 = vld [vmem:[%s1 + $0x50] sm:$0xff]
        %v314 = vld [vmem:[%s1 + $0x58] sm:$0xff]
        %v315 = vld [vmem:[%s1 + $0x60] sm:$0xff]
        %v316 = vld [vmem:[%s1 + $0x68] sm:$0xff]
        %v317 = vld [vmem:[%s1 + $0x70] sm:$0xff]
        %v318 = vld [vmem:[%s1 + $0x78] sm:$0xff]
        %v319 = vadd.f32 %v271, %v272
        %320 = vadd.xlane.f32.xlu0 %v319
        %v321 = vpop.xlane.xlu0 %320
        %v322 = vadd.f32 %v273, %v274
        %323 = vadd.xlane.f32.xlu0 %v322
        %v324 = vpop.xlane.xlu0 %323
        %v325 = vadd.f32 %v275, %v276
        %326 = vadd.xlane.f32.xlu0 %v325
        %v327 = vpop.xlane.xlu0 %326
        %v328 = vadd.f32 %v277, %v278
        %329 = vadd.xlane.f32.xlu0 %v328
        %v330 = vpop.xlane.xlu0 %329
        %v331 = vadd.f32 %v279, %v280
        %332 = vadd.xlane.f32.xlu0 %v331
        %v333 = vpop.xlane.xlu0 %332
        %v334 = vadd.f32 %v281, %v282
        %335 = vadd.xlane.f32.xlu0 %v334
        %v336 = vpop.xlane.xlu0 %335
        %v337 = vadd.f32 %v283, %v284
        %338 = vadd.xlane.f32.xlu0 %v337
        %v339 = vpop.xlane.xlu0 %338
        %v340 = vadd.f32 %v285, %v286
        %341 = vadd.xlane.f32.xlu0 %v340
        %v342 = vpop.xlane.xlu0 %341
        %v343 = vadd.f32 %v287, %v288
        %344 = vadd.xlane.f32.xlu0 %v343
        %v345 = vpop.xlane.xlu0 %344
        %v346 = vadd.f32 %v289, %v290
        %347 = vadd.xlane.f32.xlu0 %v346
        %v348 = vpop.xlane.xlu0 %347
        %v349 = vadd.f32 %v291, %v292
        %350 = vadd.xlane.f32.xlu0 %v349
        %v351 = vpop.xlane.xlu0 %350
        %v352 = vadd.f32 %v293, %v294
        %353 = vadd.xlane.f32.xlu0 %v352
        %v354 = vpop.xlane.xlu0 %353
        %v355 = vadd.f32 %v295, %v296
        %356 = vadd.xlane.f32.xlu0 %v355
        %v357 = vpop.xlane.xlu0 %356
        %v358 = vadd.f32 %v297, %v298
        %359 = vadd.xlane.f32.xlu0 %v358
        %v360 = vpop.xlane.xlu0 %359
        %v361 = vadd.f32 %v299, %v300
        %362 = vadd.xlane.f32.xlu0 %v361
        %v363 = vpop.xlane.xlu0 %362
        %v364 = vadd.f32 %v301, %v302
        %365 = vadd.xlane.f32.xlu0 %v364
        %v366 = vpop.xlane.xlu0 %365
        %v367 = vrcp.pop 256.0
        %v368 = vmul.f32 %v321, %v367
        %v369 = vmul.f32 %v324, %v367
        %v370 = vmul.f32 %v327, %v367
        %v371 = vmul.f32 %v330, %v367
        %v372 = vmul.f32 %v333, %v367
        %v373 = vmul.f32 %v336, %v367
        %v374 = vmul.f32 %v339, %v367
        %v375 = vmul.f32 %v342, %v367
        %v376 = vmul.f32 %v345, %v367
        %v377 = vmul.f32 %v348, %v367
        %v378 = vmul.f32 %v351, %v367
        %v379 = vmul.f32 %v354, %v367
        %v380 = vmul.f32 %v357, %v367
        %v381 = vmul.f32 %v360, %v367
        %v382 = vmul.f32 %v363, %v367
        %v383 = vmul.f32 %v366, %v367
        %384 = vmatprep.subr.mxu0 0.0
        %385 = vmatpush1.msra.mxu0 %v368
        %386 = vmatprep.subr.mxu0 0.0
        %387 = vmatpush1.msra.mxu0 %v369
        %388 = vmatprep.subr.mxu0 0.0
        %389 = vmatpush1.msra.mxu0 %v370
        %390 = vmatprep.subr.mxu0 0.0
        %391 = vmatpush1.msra.mxu0 %v371
        %392 = vmatprep.subr.mxu0 0.0
        %393 = vmatpush1.msra.mxu0 %v372
        %394 = vmatprep.subr.mxu0 0.0
        %395 = vmatpush1.msra.mxu0 %v373
        %396 = vmatprep.subr.mxu0 0.0
        %397 = vmatpush1.msra.mxu0 %v374
        %398 = vmatprep.subr.mxu0 0.0
        %399 = vmatpush1.msra.mxu0 %v375
        %400 = vmatprep.subr.mxu0 0.0
        %401 = vmatpush1.msra.mxu0 %v376
        %402 = vmatprep.subr.mxu0 0.0
        %403 = vmatpush1.msra.mxu0 %v377
        %404 = vmatprep.subr.mxu0 0.0
        %405 = vmatpush1.msra.mxu0 %v378
        %406 = vmatprep.subr.mxu0 0.0
        %407 = vmatpush1.msra.mxu0 %v379
        %408 = vmatprep.subr.mxu0 0.0
        %409 = vmatpush1.msra.mxu0 %v380
        %410 = vmatprep.subr.mxu0 0.0
        %411 = vmatpush1.msra.mxu0 %v381
        %412 = vmatprep.subr.mxu0 0.0
        %413 = vmatpush1.msra.mxu0 %v382
        %414 = vmatprep.subr.mxu0 0.0
        %415 = vmatpush1.msra.mxu0 %v383
        %416 = vmatprep.subr.mxu0 0.0
        %417 = vmatpush1.msra.mxu0 0.0
        %418 = vmatprep.subr.mxu0 0.0
        %419 = vmatpush1.msra.mxu0 0.0
        %420 = vmatprep.subr.mxu0 0.0
        %421 = vmatpush1.msra.mxu0 0.0
        %422 = vmatprep.subr.mxu0 0.0
        %423 = vmatpush1.msra.mxu0 0.0
        %424 = vmatprep.subr.mxu0 0.0
        %425 = vmatpush1.msra.mxu0 0.0
        %426 = vmatprep.subr.mxu0 0.0
        %427 = vmatpush1.msra.mxu0 0.0
        %428 = vmatprep.subr.mxu0 0.0
        %429 = vmatpush1.msra.mxu0 0.0
        %430 = vmatprep.subr.mxu0 0.0
        %431 = vmatpush1.msra.mxu0 0.0
        %432 = vmatprep.subr.mxu0 0.0
        %433 = vmatpush1.msra.mxu0 0.0
        %434 = vmatprep.subr.mxu0 0.0
        %435 = vmatpush1.msra.mxu0 0.0
        %436 = vmatprep.subr.mxu0 0.0
        %437 = vmatpush1.msra.mxu0 0.0
        %438 = vmatprep.subr.mxu0 0.0
        %439 = vmatpush1.msra.mxu0 0.0
        %440 = vmatprep.subr.mxu0 0.0
        %441 = vmatpush1.msra.mxu0 0.0
        %442 = vmatprep.subr.mxu0 0.0
        %443 = vmatpush1.msra.mxu0 0.0
        %444 = vmatprep.subr.mxu0 0.0
        %445 = vmatpush1.msra.mxu0 0.0
        %446 = vmatprep.subr.mxu0 0.0
        %447 = vmatpush1.msra.mxu0 0.0
        %448 = vmatprep.mubr.f32.mxu0 0.0
        %449 = vmatmul.mubr.f32.gmra.mrb[0].mxu0 %v303
        %v450 = vpop.f32.mrb[0].mxu0
        %v451 = vadd.f32 0.0, %v450
        %v452 = vpop.f32.mrb[0].mxu0
        %453 = vmatprep.mubr.f32.mxu0 0.0
        %454 = vmatmul.mubr.f32.gmra.mrb[0].mxu0 %v304
        %v455 = vpop.f32.mrb[0].mxu0
        %v456 = vadd.f32 0.0, %v455
        %v457 = vpop.f32.mrb[0].mxu0
        %458 = vmatprep.mubr.f32.mxu0 0.0
        %459 = vmatmul.mubr.f32.gmra.mrb[0].mxu0 %v305
        %v460 = vpop.f32.mrb[0].mxu0
        %v461 = vadd.f32 0.0, %v460
        %v462 = vpop.f32.mrb[0].mxu0
        %463 = vmatprep.mubr.f32.mxu0 0.0
        %464 = vmatmul.mubr.f32.gmra.mrb[0].mxu0 %v306
        %v465 = vpop.f32.mrb[0].mxu0
        %v466 = vadd.f32 0.0, %v465
        %v467 = vpop.f32.mrb[0].mxu0
        %468 = vmatprep.mubr.f32.mxu0 0.0
        %469 = vmatmul.mubr.f32.gmra.mrb[0].mxu0 %v307
        %v470 = vpop.f32.mrb[0].mxu0
        %v471 = vadd.f32 0.0, %v470
        %v472 = vpop.f32.mrb[0].mxu0
        %473 = vmatprep.mubr.f32.mxu0 0.0
        %474 = vmatmul.mubr.f32.gmra.mrb[0].mxu0 %v308
        %v475 = vpop.f32.mrb[0].mxu0
        %v476 = vadd.f32 0.0, %v475
        %v477 = vpop.f32.mrb[0].mxu0
        %478 = vmatprep.mubr.f32.mxu0 0.0
        %479 = vmatmul.mubr.f32.gmra.mrb[0].mxu0 %v309
        %v480 = vpop.f32.mrb[0].mxu0
        %v481 = vadd.f32 0.0, %v480
        %v482 = vpop.f32.mrb[0].mxu0
        %483 = vmatprep.mubr.f32.mxu0 0.0
        %484 = vmatmul.mubr.f32.gmra.mrb[0].mxu0 %v310
        %v485 = vpop.f32.mrb[0].mxu0
        %v486 = vadd.f32 0.0, %v485
        %v487 = vpop.f32.mrb[0].mxu0
        %488 = vmatprep.mubr.f32.mxu0 0.0
        %489 = vmatmul.mubr.f32.gmra.mrb[0].mxu0 %v311
        %v490 = vpop.f32.mrb[0].mxu0
        %v491 = vadd.f32 0.0, %v490
        %v492 = vpop.f32.mrb[0].mxu0
        %493 = vmatprep.mubr.f32.mxu0 0.0
        %494 = vmatmul.mubr.f32.gmra.mrb[0].mxu0 %v312
        %v495 = vpop.f32.mrb[0].mxu0
        %v496 = vadd.f32 0.0, %v495
        %v497 = vpop.f32.mrb[0].mxu0
        %498 = vmatprep.mubr.f32.mxu0 0.0
        %499 = vmatmul.mubr.f32.gmra.mrb[0].mxu0 %v313
        %v500 = vpop.f32.mrb[0].mxu0
        %v501 = vadd.f32 0.0, %v500
        %v502 = vpop.f32.mrb[0].mxu0
        %503 = vmatprep.mubr.f32.mxu0 0.0
        %504 = vmatmul.mubr.f32.gmra.mrb[0].mxu0 %v314
        %v505 = vpop.f32.mrb[0].mxu0
        %v506 = vadd.f32 0.0, %v505
        %v507 = vpop.f32.mrb[0].mxu0
        %508 = vmatprep.mubr.f32.mxu0 0.0
        %509 = vmatmul.mubr.f32.gmra.mrb[0].mxu0 %v315
        %v510 = vpop.f32.mrb[0].mxu0
        %v511 = vadd.f32 0.0, %v510
        %v512 = vpop.f32.mrb[0].mxu0
        %513 = vmatprep.mubr.f32.mxu0 0.0
        %514 = vmatmul.mubr.f32.gmra.mrb[0].mxu0 %v316
        %v515 = vpop.f32.mrb[0].mxu0
        %v516 = vadd.f32 0.0, %v515
        %v517 = vpop.f32.mrb[0].mxu0
        %518 = vmatprep.mubr.f32.mxu0 0.0
        %519 = vmatmul.mubr.f32.gmra.mrb[0].mxu0 %v317
        %v520 = vpop.f32.mrb[0].mxu0
        %v521 = vadd.f32 0.0, %v520
        %v522 = vpop.f32.mrb[0].mxu0
        %523 = vmatprep.mubr.f32.mxu0 0.0
        %524 = vmatmul.mubr.f32.gmra.mrb[0].mxu0 %v318
        %v525 = vpop.f32.mrb[0].mxu0
        %v526 = vadd.f32 0.0, %v525
        %v527 = vpop.f32.mrb[0].mxu0
        %528 = vdwg.mxu0
        %530 = vset.pattern.permute.xlu0 0
        %531 = vperm.xlu0 %530, %v451
        %v532 = vpop.permute.xlu0 %531
        %535 = vset.pattern.permute.xlu0 0
        %536 = vperm.xlu0 %535, %v456
        %v537 = vpop.permute.xlu0 %536
        %540 = vset.pattern.permute.xlu0 0
        %541 = vperm.xlu0 %540, %v461
        %v542 = vpop.permute.xlu0 %541
        %545 = vset.pattern.permute.xlu0 0
        %546 = vperm.xlu0 %545, %v466
        %v547 = vpop.permute.xlu0 %546
        %550 = vset.pattern.permute.xlu0 0
        %551 = vperm.xlu0 %550, %v471
        %v552 = vpop.permute.xlu0 %551
        %555 = vset.pattern.permute.xlu0 0
        %556 = vperm.xlu0 %555, %v476
        %v557 = vpop.permute.xlu0 %556
        %560 = vset.pattern.permute.xlu0 0
        %561 = vperm.xlu0 %560, %v481
        %v562 = vpop.permute.xlu0 %561
        %565 = vset.pattern.permute.xlu0 0
        %566 = vperm.xlu0 %565, %v486
        %v567 = vpop.permute.xlu0 %566
        %570 = vset.pattern.permute.xlu0 0
        %571 = vperm.xlu0 %570, %v491
        %v572 = vpop.permute.xlu0 %571
        %575 = vset.pattern.permute.xlu0 0
        %576 = vperm.xlu0 %575, %v496
        %v577 = vpop.permute.xlu0 %576
        %580 = vset.pattern.permute.xlu0 0
        %581 = vperm.xlu0 %580, %v501
        %v582 = vpop.permute.xlu0 %581
        %585 = vset.pattern.permute.xlu0 0
        %586 = vperm.xlu0 %585, %v506
        %v587 = vpop.permute.xlu0 %586
        %590 = vset.pattern.permute.xlu0 0
        %591 = vperm.xlu0 %590, %v511
        %v592 = vpop.permute.xlu0 %591
        %595 = vset.pattern.permute.xlu0 0
        %596 = vperm.xlu0 %595, %v516
        %v597 = vpop.permute.xlu0 %596
        %600 = vset.pattern.permute.xlu0 0
        %601 = vperm.xlu0 %600, %v521
        %v602 = vpop.permute.xlu0 %601
        %605 = vset.pattern.permute.xlu0 0
        %606 = vperm.xlu0 %605, %v526
        %v607 = vpop.permute.xlu0 %606
        %v609 = vsub.f32 %v271, %v532
        %v610 = vsub.f32 %v272, %v532
        %v611 = vsub.f32 %v273, %v537
        %v612 = vsub.f32 %v274, %v537
        %v613 = vsub.f32 %v275, %v542
        %v614 = vsub.f32 %v276, %v542
        %v615 = vsub.f32 %v277, %v547
        %v616 = vsub.f32 %v278, %v547
        %v617 = vsub.f32 %v279, %v552
        %v618 = vsub.f32 %v280, %v552
        %v619 = vsub.f32 %v281, %v557
        %v620 = vsub.f32 %v282, %v557
        %v621 = vsub.f32 %v283, %v562
        %v622 = vsub.f32 %v284, %v562
        %v623 = vsub.f32 %v285, %v567
        %v624 = vsub.f32 %v286, %v567
        %v625 = vsub.f32 %v287, %v572
        %v626 = vsub.f32 %v288, %v572
        %v627 = vsub.f32 %v289, %v577
        %v628 = vsub.f32 %v290, %v577
        %v629 = vsub.f32 %v291, %v582
        %v630 = vsub.f32 %v292, %v582
        %v631 = vsub.f32 %v293, %v587
        %v632 = vsub.f32 %v294, %v587
        %v633 = vsub.f32 %v295, %v592
        %v634 = vsub.f32 %v296, %v592
        %v635 = vsub.f32 %v297, %v597
        %v636 = vsub.f32 %v298, %v597
        %v637 = vsub.f32 %v299, %v602
        %v638 = vsub.f32 %v300, %v602
        %v639 = vsub.f32 %v301, %v607
        %v640 = vsub.f32 %v302, %v607
        %v641 = vmul.f32 %v609, %v609
        %v642 = vmul.f32 %v610, %v610
        %v643 = vmul.f32 %v611, %v611
        %v644 = vmul.f32 %v612, %v612
        %v645 = vmul.f32 %v613, %v613
        %v646 = vmul.f32 %v614, %v614
        %v647 = vmul.f32 %v615, %v615
        %v648 = vmul.f32 %v616, %v616
        %v649 = vmul.f32 %v617, %v617
        %v650 = vmul.f32 %v618, %v618
        %v651 = vmul.f32 %v619, %v619
        %v652 = vmul.f32 %v620, %v620
        %v653 = vmul.f32 %v621, %v621
        %v654 = vmul.f32 %v622, %v622
        %v655 = vmul.f32 %v623, %v623
        %v656 = vmul.f32 %v624, %v624
        %v657 = vmul.f32 %v625, %v625
        %v658 = vmul.f32 %v626, %v626
        %v659 = vmul.f32 %v627, %v627
        %v660 = vmul.f32 %v628, %v628
        %v661 = vmul.f32 %v629, %v629
        %v662 = vmul.f32 %v630, %v630
        %v663 = vmul.f32 %v631, %v631
        %v664 = vmul.f32 %v632, %v632
        %v665 = vmul.f32 %v633, %v633
        %v666 = vmul.f32 %v634, %v634
        %v667 = vmul.f32 %v635, %v635
        %v668 = vmul.f32 %v636, %v636
        %v669 = vmul.f32 %v637, %v637
        %v670 = vmul.f32 %v638, %v638
        %v671 = vmul.f32 %v639, %v639
        %v672 = vmul.f32 %v640, %v640
        %v673 = vadd.f32 %v641, %v642
        %674 = vadd.xlane.f32.xlu0 %v673
        %v675 = vpop.xlane.xlu0 %674
        %v676 = vadd.f32 %v643, %v644
        %677 = vadd.xlane.f32.xlu0 %v676
        %v678 = vpop.xlane.xlu0 %677
        %v679 = vadd.f32 %v645, %v646
        %680 = vadd.xlane.f32.xlu0 %v679
        %v681 = vpop.xlane.xlu0 %680
        %v682 = vadd.f32 %v647, %v648
        %683 = vadd.xlane.f32.xlu0 %v682
        %v684 = vpop.xlane.xlu0 %683
        %v685 = vadd.f32 %v649, %v650
        %686 = vadd.xlane.f32.xlu0 %v685
        %v687 = vpop.xlane.xlu0 %686
        %v688 = vadd.f32 %v651, %v652
        %689 = vadd.xlane.f32.xlu0 %v688
        %v690 = vpop.xlane.xlu0 %689
        %v691 = vadd.f32 %v653, %v654
        %692 = vadd.xlane.f32.xlu0 %v691
        %v693 = vpop.xlane.xlu0 %692
        %v694 = vadd.f32 %v655, %v656
        %695 = vadd.xlane.f32.xlu0 %v694
        %v696 = vpop.xlane.xlu0 %695
        %v697 = vadd.f32 %v657, %v658
        %698 = vadd.xlane.f32.xlu0 %v697
        %v699 = vpop.xlane.xlu0 %698
        %v700 = vadd.f32 %v659, %v660
        %701 = vadd.xlane.f32.xlu0 %v700
        %v702 = vpop.xlane.xlu0 %701
        %v703 = vadd.f32 %v661, %v662
        %704 = vadd.xlane.f32.xlu0 %v703
        %v705 = vpop.xlane.xlu0 %704
        %v706 = vadd.f32 %v663, %v664
        %707 = vadd.xlane.f32.xlu0 %v706
        %v708 = vpop.xlane.xlu0 %707
        %v709 = vadd.f32 %v665, %v666
        %710 = vadd.xlane.f32.xlu0 %v709
        %v711 = vpop.xlane.xlu0 %710
        %v712 = vadd.f32 %v667, %v668
        %713 = vadd.xlane.f32.xlu0 %v712
        %v714 = vpop.xlane.xlu0 %713
        %v715 = vadd.f32 %v669, %v670
        %716 = vadd.xlane.f32.xlu0 %v715
        %v717 = vpop.xlane.xlu0 %716
        %v718 = vadd.f32 %v671, %v672
        %719 = vadd.xlane.f32.xlu0 %v718
        %v720 = vpop.xlane.xlu0 %719
        %v721 = vmul.f32 %v675, %v367
        %v722 = vmul.f32 %v678, %v367
        %v723 = vmul.f32 %v681, %v367
        %v724 = vmul.f32 %v684, %v367
        %v725 = vmul.f32 %v687, %v367
        %v726 = vmul.f32 %v690, %v367
        %v727 = vmul.f32 %v693, %v367
        %v728 = vmul.f32 %v696, %v367
        %v729 = vmul.f32 %v699, %v367
        %v730 = vmul.f32 %v702, %v367
        %v731 = vmul.f32 %v705, %v367
        %v732 = vmul.f32 %v708, %v367
        %v733 = vmul.f32 %v711, %v367
        %v734 = vmul.f32 %v714, %v367
        %v735 = vmul.f32 %v717, %v367
        %v736 = vmul.f32 %v720, %v367
        %737 = vmatprep.subr.mxu0 0.0
        %738 = vmatpush1.msra.mxu0 %v721
        %739 = vmatprep.subr.mxu0 0.0
        %740 = vmatpush1.msra.mxu0 %v722
        %741 = vmatprep.subr.mxu0 0.0
        %742 = vmatpush1.msra.mxu0 %v723
        %743 = vmatprep.subr.mxu0 0.0
        %744 = vmatpush1.msra.mxu0 %v724
        %745 = vmatprep.subr.mxu0 0.0
        %746 = vmatpush1.msra.mxu0 %v725
        %747 = vmatprep.subr.mxu0 0.0
        %748 = vmatpush1.msra.mxu0 %v726
        %749 = vmatprep.subr.mxu0 0.0
        %750 = vmatpush1.msra.mxu0 %v727
        %751 = vmatprep.subr.mxu0 0.0
        %752 = vmatpush1.msra.mxu0 %v728
        %753 = vmatprep.subr.mxu0 0.0
        %754 = vmatpush1.msra.mxu0 %v729
        %755 = vmatprep.subr.mxu0 0.0
        %756 = vmatpush1.msra.mxu0 %v730
        %757 = vmatprep.subr.mxu0 0.0
        %758 = vmatpush1.msra.mxu0 %v731
        %759 = vmatprep.subr.mxu0 0.0
        %760 = vmatpush1.msra.mxu0 %v732
        %761 = vmatprep.subr.mxu0 0.0
        %762 = vmatpush1.msra.mxu0 %v733
        %763 = vmatprep.subr.mxu0 0.0
        %764 = vmatpush1.msra.mxu0 %v734
        %765 = vmatprep.subr.mxu0 0.0
        %766 = vmatpush1.msra.mxu0 %v735
        %767 = vmatprep.subr.mxu0 0.0
        %768 = vmatpush1.msra.mxu0 %v736
        %769 = vmatprep.subr.mxu0 0.0
        %770 = vmatpush1.msra.mxu0 0.0
        %771 = vmatprep.subr.mxu0 0.0
        %772 = vmatpush1.msra.mxu0 0.0
        %773 = vmatprep.subr.mxu0 0.0
        %774 = vmatpush1.msra.mxu0 0.0
        %775 = vmatprep.subr.mxu0 0.0
        %776 = vmatpush1.msra.mxu0 0.0
        %777 = vmatprep.subr.mxu0 0.0
        %778 = vmatpush1.msra.mxu0 0.0
        %779 = vmatprep.subr.mxu0 0.0
        %780 = vmatpush1.msra.mxu0 0.0
        %781 = vmatprep.subr.mxu0 0.0
        %782 = vmatpush1.msra.mxu0 0.0
        %783 = vmatprep.subr.mxu0 0.0
        %784 = vmatpush1.msra.mxu0 0.0
        %785 = vmatprep.subr.mxu0 0.0
        %786 = vmatpush1.msra.mxu0 0.0
        %787 = vmatprep.subr.mxu0 0.0
        %788 = vmatpush1.msra.mxu0 0.0
        %789 = vmatprep.subr.mxu0 0.0
        %790 = vmatpush1.msra.mxu0 0.0
        %791 = vmatprep.subr.mxu0 0.0
        %792 = vmatpush1.msra.mxu0 0.0
        %793 = vmatprep.subr.mxu0 0.0
        %794 = vmatpush1.msra.mxu0 0.0
        %795 = vmatprep.subr.mxu0 0.0
        %796 = vmatpush1.msra.mxu0 0.0
        %797 = vmatprep.subr.mxu0 0.0
        %798 = vmatpush1.msra.mxu0 0.0
        %799 = vmatprep.subr.mxu0 0.0
        %800 = vmatpush1.msra.mxu0 0.0
        %801 = vmatprep.mubr.f32.mxu0 0.0
        %802 = vmatmul.mubr.f32.gmra.mrb[0].mxu0 %v303
        %v803 = vpop.f32.mrb[0].mxu0
        %v804 = vadd.f32 1e-05, %v803
        %v805 = vpop.f32.mrb[0].mxu0
        %806 = vmatprep.mubr.f32.mxu0 0.0
        %807 = vmatmul.mubr.f32.gmra.mrb[0].mxu0 %v304
        %v808 = vpop.f32.mrb[0].mxu0
        %v809 = vadd.f32 1e-05, %v808
        %v810 = vpop.f32.mrb[0].mxu0
        %811 = vmatprep.mubr.f32.mxu0 0.0
        %812 = vmatmul.mubr.f32.gmra.mrb[0].mxu0 %v305
        %v813 = vpop.f32.mrb[0].mxu0
        %v814 = vadd.f32 1e-05, %v813
        %v815 = vpop.f32.mrb[0].mxu0
        %816 = vmatprep.mubr.f32.mxu0 0.0
        %817 = vmatmul.mubr.f32.gmra.mrb[0].mxu0 %v306
        %v818 = vpop.f32.mrb[0].mxu0
        %v819 = vadd.f32 1e-05, %v818
        %v820 = vpop.f32.mrb[0].mxu0
        %821 = vmatprep.mubr.f32.mxu0 0.0
        %822 = vmatmul.mubr.f32.gmra.mrb[0].mxu0 %v307
        %v823 = vpop.f32.mrb[0].mxu0
        %v824 = vadd.f32 1e-05, %v823
        %v825 = vpop.f32.mrb[0].mxu0
        %826 = vmatprep.mubr.f32.mxu0 0.0
        %827 = vmatmul.mubr.f32.gmra.mrb[0].mxu0 %v308
        %v828 = vpop.f32.mrb[0].mxu0
        %v829 = vadd.f32 1e-05, %v828
        %v830 = vpop.f32.mrb[0].mxu0
        %831 = vmatprep.mubr.f32.mxu0 0.0
        %832 = vmatmul.mubr.f32.gmra.mrb[0].mxu0 %v309
        %v833 = vpop.f32.mrb[0].mxu0
        %v834 = vadd.f32 1e-05, %v833
        %v835 = vpop.f32.mrb[0].mxu0
        %836 = vmatprep.mubr.f32.mxu0 0.0
        %837 = vmatmul.mubr.f32.gmra.mrb[0].mxu0 %v310
        %v838 = vpop.f32.mrb[0].mxu0
        %v839 = vadd.f32 1e-05, %v838
        %v840 = vpop.f32.mrb[0].mxu0
        %841 = vmatprep.mubr.f32.mxu0 0.0
        %842 = vmatmul.mubr.f32.gmra.mrb[0].mxu0 %v311
        %v843 = vpop.f32.mrb[0].mxu0
        %v844 = vadd.f32 1e-05, %v843
        %v845 = vpop.f32.mrb[0].mxu0
        %846 = vmatprep.mubr.f32.mxu0 0.0
        %847 = vmatmul.mubr.f32.gmra.mrb[0].mxu0 %v312
        %v848 = vpop.f32.mrb[0].mxu0
        %v849 = vadd.f32 1e-05, %v848
        %v850 = vpop.f32.mrb[0].mxu0
        %851 = vmatprep.mubr.f32.mxu0 0.0
        %852 = vmatmul.mubr.f32.gmra.mrb[0].mxu0 %v313
        %v853 = vpop.f32.mrb[0].mxu0
        %v854 = vadd.f32 1e-05, %v853
        %v855 = vpop.f32.mrb[0].mxu0
        %856 = vmatprep.mubr.f32.mxu0 0.0
        %857 = vmatmul.mubr.f32.gmra.mrb[0].mxu0 %v314
        %v858 = vpop.f32.mrb[0].mxu0
        %v859 = vadd.f32 1e-05, %v858
        %v860 = vpop.f32.mrb[0].mxu0
        %861 = vmatprep.mubr.f32.mxu0 0.0
        %862 = vmatmul.mubr.f32.gmra.mrb[0].mxu0 %v315
        %v863 = vpop.f32.mrb[0].mxu0
        %v864 = vadd.f32 1e-05, %v863
        %v865 = vpop.f32.mrb[0].mxu0
        %866 = vmatprep.mubr.f32.mxu0 0.0
        %867 = vmatmul.mubr.f32.gmra.mrb[0].mxu0 %v316
        %v868 = vpop.f32.mrb[0].mxu0
        %v869 = vadd.f32 1e-05, %v868
        %v870 = vpop.f32.mrb[0].mxu0
        %871 = vmatprep.mubr.f32.mxu0 0.0
        %872 = vmatmul.mubr.f32.gmra.mrb[0].mxu0 %v317
        %v873 = vpop.f32.mrb[0].mxu0
        %v874 = vadd.f32 1e-05, %v873
        %v875 = vpop.f32.mrb[0].mxu0
        %876 = vmatprep.mubr.f32.mxu0 0.0
        %877 = vmatmul.mubr.f32.gmra.mrb[0].mxu0 %v318
        %v878 = vpop.f32.mrb[0].mxu0
        %v879 = vadd.f32 1e-05, %v878
        %v880 = vpop.f32.mrb[0].mxu0
        %881 = vdwg.mxu0
        %v882 = vrsqrt.pop %v804
        %v883 = vrsqrt.pop %v809
        %v884 = vrsqrt.pop %v814
        %v885 = vrsqrt.pop %v819
        %v886 = vrsqrt.pop %v824
        %v887 = vrsqrt.pop %v829
        %v888 = vrsqrt.pop %v834
        %v889 = vrsqrt.pop %v839
        %v890 = vrsqrt.pop %v844
        %v891 = vrsqrt.pop %v849
        %v892 = vrsqrt.pop %v854
        %v893 = vrsqrt.pop %v859
        %v894 = vrsqrt.pop %v864
        %v895 = vrsqrt.pop %v869
        %v896 = vrsqrt.pop %v874
        %v897 = vrsqrt.pop %v879
        %899 = vset.pattern.permute.xlu0 0
        %900 = vperm.xlu0 %899, %v882
        %v901 = vpop.permute.xlu0 %900
        %904 = vset.pattern.permute.xlu0 0
        %905 = vperm.xlu0 %904, %v883
        %v906 = vpop.permute.xlu0 %905
        %909 = vset.pattern.permute.xlu0 0
        %910 = vperm.xlu0 %909, %v884
        %v911 = vpop.permute.xlu0 %910
        %914 = vset.pattern.permute.xlu0 0
        %915 = vperm.xlu0 %914, %v885
        %v916 = vpop.permute.xlu0 %915
        %919 = vset.pattern.permute.xlu0 0
        %920 = vperm.xlu0 %919, %v886
        %v921 = vpop.permute.xlu0 %920
        %924 = vset.pattern.permute.xlu0 0
        %925 = vperm.xlu0 %924, %v887
        %v926 = vpop.permute.xlu0 %925
        %929 = vset.pattern.permute.xlu0 0
        %930 = vperm.xlu0 %929, %v888
        %v931 = vpop.permute.xlu0 %930
        %934 = vset.pattern.permute.xlu0 0
        %935 = vperm.xlu0 %934, %v889
        %v936 = vpop.permute.xlu0 %935
        %939 = vset.pattern.permute.xlu0 0
        %940 = vperm.xlu0 %939, %v890
        %v941 = vpop.permute.xlu0 %940
        %944 = vset.pattern.permute.xlu0 0
        %945 = vperm.xlu0 %944, %v891
        %v946 = vpop.permute.xlu0 %945
        %949 = vset.pattern.permute.xlu0 0
        %950 = vperm.xlu0 %949, %v892
        %v951 = vpop.permute.xlu0 %950
        %954 = vset.pattern.permute.xlu0 0
        %955 = vperm.xlu0 %954, %v893
        %v956 = vpop.permute.xlu0 %955
        %959 = vset.pattern.permute.xlu0 0
        %960 = vperm.xlu0 %959, %v894
        %v961 = vpop.permute.xlu0 %960
        %964 = vset.pattern.permute.xlu0 0
        %965 = vperm.xlu0 %964, %v895
        %v966 = vpop.permute.xlu0 %965
        %969 = vset.pattern.permute.xlu0 0
        %970 = vperm.xlu0 %969, %v896
        %v971 = vpop.permute.xlu0 %970
        %974 = vset.pattern.permute.xlu0 0
        %975 = vperm.xlu0 %974, %v897
        %v976 = vpop.permute.xlu0 %975
        %v978 = vmul.f32 %v609, %v901
        %v979 = vmul.f32 %v610, %v901
        %v980 = vmul.f32 %v611, %v906
        %v981 = vmul.f32 %v612, %v906
        %v982 = vmul.f32 %v613, %v911
        %v983 = vmul.f32 %v614, %v911
        %v984 = vmul.f32 %v615, %v916
        %v985 = vmul.f32 %v616, %v916
        %v986 = vmul.f32 %v617, %v921
        %v987 = vmul.f32 %v618, %v921
        %v988 = vmul.f32 %v619, %v926
        %v989 = vmul.f32 %v620, %v926
        %v990 = vmul.f32 %v621, %v931
        %v991 = vmul.f32 %v622, %v931
        %v992 = vmul.f32 %v623, %v936
        %v993 = vmul.f32 %v624, %v936
        %v994 = vmul.f32 %v625, %v941
        %v995 = vmul.f32 %v626, %v941
        %v996 = vmul.f32 %v627, %v946
        %v997 = vmul.f32 %v628, %v946
        %v998 = vmul.f32 %v629, %v951
        %v999 = vmul.f32 %v630, %v951
        %v1000 = vmul.f32 %v631, %v956
        %v1001 = vmul.f32 %v632, %v956
        %v1002 = vmul.f32 %v633, %v961
        %v1003 = vmul.f32 %v634, %v961
        %v1004 = vmul.f32 %v635, %v966
        %v1005 = vmul.f32 %v636, %v966
        %v1006 = vmul.f32 %v637, %v971
        %v1007 = vmul.f32 %v638, %v971
        %v1008 = vmul.f32 %v639, %v976
        %v1009 = vmul.f32 %v640, %v976
        %v1010 = vld [vmem:[%s2] sm:$0xff]
        %v1011 = vld [vmem:[%s2 + $0x8] sm:$0xff]
        %v1012 = vld [vmem:[%s2 + $0x10] sm:$0xff]
        %v1013 = vld [vmem:[%s2 + $0x18] sm:$0xff]
        %v1014 = vld [vmem:[%s2 + $0x20] sm:$0xff]
        %v1015 = vld [vmem:[%s2 + $0x28] sm:$0xff]
        %v1016 = vld [vmem:[%s2 + $0x30] sm:$0xff]
        %v1017 = vld [vmem:[%s2 + $0x38] sm:$0xff]
        %v1018 = vld [vmem:[%s2 + $0x40] sm:$0xff]
        %v1019 = vld [vmem:[%s2 + $0x48] sm:$0xff]
        %v1020 = vld [vmem:[%s2 + $0x50] sm:$0xff]
        %v1021 = vld [vmem:[%s2 + $0x58] sm:$0xff]
        %v1022 = vld [vmem:[%s2 + $0x60] sm:$0xff]
        %v1023 = vld [vmem:[%s2 + $0x68] sm:$0xff]
        %v1024 = vld [vmem:[%s2 + $0x70] sm:$0xff]
        %v1025 = vld [vmem:[%s2 + $0x78] sm:$0xff]
        %1027 = vset.pattern.permute.xlu0 0
        %1028 = vperm.xlu0 %1027, %v1010
        %v1029 = vpop.permute.xlu0 %1028
        %1032 = vset.pattern.permute.xlu0 0
        %1033 = vperm.xlu0 %1032, %v1011
        %v1034 = vpop.permute.xlu0 %1033
        %1037 = vset.pattern.permute.xlu0 0
        %1038 = vperm.xlu0 %1037, %v1012
        %v1039 = vpop.permute.xlu0 %1038
        %1042 = vset.pattern.permute.xlu0 0
        %1043 = vperm.xlu0 %1042, %v1013
        %v1044 = vpop.permute.xlu0 %1043
        %1047 = vset.pattern.permute.xlu0 0
        %1048 = vperm.xlu0 %1047, %v1014
        %v1049 = vpop.permute.xlu0 %1048
        %1052 = vset.pattern.permute.xlu0 0
        %1053 = vperm.xlu0 %1052, %v1015
        %v1054 = vpop.permute.xlu0 %1053
        %1057 = vset.pattern.permute.xlu0 0
        %1058 = vperm.xlu0 %1057, %v1016
        %v1059 = vpop.permute.xlu0 %1058
        %1062 = vset.pattern.permute.xlu0 0
        %1063 = vperm.xlu0 %1062, %v1017
        %v1064 = vpop.permute.xlu0 %1063
        %1067 = vset.pattern.permute.xlu0 0
        %1068 = vperm.xlu0 %1067, %v1018
        %v1069 = vpop.permute.xlu0 %1068
        %1072 = vset.pattern.permute.xlu0 0
        %1073 = vperm.xlu0 %1072, %v1019
        %v1074 = vpop.permute.xlu0 %1073
        %1077 = vset.pattern.permute.xlu0 0
        %1078 = vperm.xlu0 %1077, %v1020
        %v1079 = vpop.permute.xlu0 %1078
        %1082 = vset.pattern.permute.xlu0 0
        %1083 = vperm.xlu0 %1082, %v1021
        %v1084 = vpop.permute.xlu0 %1083
        %1087 = vset.pattern.permute.xlu0 0
        %1088 = vperm.xlu0 %1087, %v1022
        %v1089 = vpop.permute.xlu0 %1088
        %1092 = vset.pattern.permute.xlu0 0
        %1093 = vperm.xlu0 %1092, %v1023
        %v1094 = vpop.permute.xlu0 %1093
        %1097 = vset.pattern.permute.xlu0 0
        %1098 = vperm.xlu0 %1097, %v1024
        %v1099 = vpop.permute.xlu0 %1098
        %1102 = vset.pattern.permute.xlu0 0
        %1103 = vperm.xlu0 %1102, %v1025
        %v1104 = vpop.permute.xlu0 %1103
        %v1106 = vmul.f32 %v978, %v1029
        %v1107 = vmul.f32 %v979, %v1029
        %v1108 = vmul.f32 %v980, %v1034
        %v1109 = vmul.f32 %v981, %v1034
        %v1110 = vmul.f32 %v982, %v1039
        %v1111 = vmul.f32 %v983, %v1039
        %v1112 = vmul.f32 %v984, %v1044
        %v1113 = vmul.f32 %v985, %v1044
        %v1114 = vmul.f32 %v986, %v1049
        %v1115 = vmul.f32 %v987, %v1049
        %v1116 = vmul.f32 %v988, %v1054
        %v1117 = vmul.f32 %v989, %v1054
        %v1118 = vmul.f32 %v990, %v1059
        %v1119 = vmul.f32 %v991, %v1059
        %v1120 = vmul.f32 %v992, %v1064
        %v1121 = vmul.f32 %v993, %v1064
        %v1122 = vmul.f32 %v994, %v1069
        %v1123 = vmul.f32 %v995, %v1069
        %v1124 = vmul.f32 %v996, %v1074
        %v1125 = vmul.f32 %v997, %v1074
        %v1126 = vmul.f32 %v998, %v1079
        %v1127 = vmul.f32 %v999, %v1079
        %v1128 = vmul.f32 %v1000, %v1084
        %v1129 = vmul.f32 %v1001, %v1084
        %v1130 = vmul.f32 %v1002, %v1089
        %v1131 = vmul.f32 %v1003, %v1089
        %v1132 = vmul.f32 %v1004, %v1094
        %v1133 = vmul.f32 %v1005, %v1094
        %v1134 = vmul.f32 %v1006, %v1099
        %v1135 = vmul.f32 %v1007, %v1099
        %v1136 = vmul.f32 %v1008, %v1104
        %v1137 = vmul.f32 %v1009, %v1104
        %v1138 = vld [vmem:[%s3] sm:$0xff]
        %v1139 = vld [vmem:[%s3 + $0x8] sm:$0xff]
        %v1140 = vld [vmem:[%s3 + $0x10] sm:$0xff]
        %v1141 = vld [vmem:[%s3 + $0x18] sm:$0xff]
        %v1142 = vld [vmem:[%s3 + $0x20] sm:$0xff]
        %v1143 = vld [vmem:[%s3 + $0x28] sm:$0xff]
        %v1144 = vld [vmem:[%s3 + $0x30] sm:$0xff]
        %v1145 = vld [vmem:[%s3 + $0x38] sm:$0xff]
        %v1146 = vld [vmem:[%s3 + $0x40] sm:$0xff]
        %v1147 = vld [vmem:[%s3 + $0x48] sm:$0xff]
        %v1148 = vld [vmem:[%s3 + $0x50] sm:$0xff]
        %v1149 = vld [vmem:[%s3 + $0x58] sm:$0xff]
        %v1150 = vld [vmem:[%s3 + $0x60] sm:$0xff]
        %v1151 = vld [vmem:[%s3 + $0x68] sm:$0xff]
        %v1152 = vld [vmem:[%s3 + $0x70] sm:$0xff]
        %v1153 = vld [vmem:[%s3 + $0x78] sm:$0xff]
        %1155 = vset.pattern.permute.xlu0 0
        %1156 = vperm.xlu0 %1155, %v1138
        %v1157 = vpop.permute.xlu0 %1156
        %1160 = vset.pattern.permute.xlu0 0
        %1161 = vperm.xlu0 %1160, %v1139
        %v1162 = vpop.permute.xlu0 %1161
        %1165 = vset.pattern.permute.xlu0 0
        %1166 = vperm.xlu0 %1165, %v1140
        %v1167 = vpop.permute.xlu0 %1166
        %1170 = vset.pattern.permute.xlu0 0
        %1171 = vperm.xlu0 %1170, %v1141
        %v1172 = vpop.permute.xlu0 %1171
        %1175 = vset.pattern.permute.xlu0 0
        %1176 = vperm.xlu0 %1175, %v1142
        %v1177 = vpop.permute.xlu0 %1176
        %1180 = vset.pattern.permute.xlu0 0
        %1181 = vperm.xlu0 %1180, %v1143
        %v1182 = vpop.permute.xlu0 %1181
        %1185 = vset.pattern.permute.xlu0 0
        %1186 = vperm.xlu0 %1185, %v1144
        %v1187 = vpop.permute.xlu0 %1186
        %1190 = vset.pattern.permute.xlu0 0
        %1191 = vperm.xlu0 %1190, %v1145
        %v1192 = vpop.permute.xlu0 %1191
        %1195 = vset.pattern.permute.xlu0 0
        %1196 = vperm.xlu0 %1195, %v1146
        %v1197 = vpop.permute.xlu0 %1196
        %1200 = vset.pattern.permute.xlu0 0
        %1201 = vperm.xlu0 %1200, %v1147
        %v1202 = vpop.permute.xlu0 %1201
        %1205 = vset.pattern.permute.xlu0 0
        %1206 = vperm.xlu0 %1205, %v1148
        %v1207 = vpop.permute.xlu0 %1206
        %1210 = vset.pattern.permute.xlu0 0
        %1211 = vperm.xlu0 %1210, %v1149
        %v1212 = vpop.permute.xlu0 %1211
        %1215 = vset.pattern.permute.xlu0 0
        %1216 = vperm.xlu0 %1215, %v1150
        %v1217 = vpop.permute.xlu0 %1216
        %1220 = vset.pattern.permute.xlu0 0
        %1221 = vperm.xlu0 %1220, %v1151
        %v1222 = vpop.permute.xlu0 %1221
        %1225 = vset.pattern.permute.xlu0 0
        %1226 = vperm.xlu0 %1225, %v1152
        %v1227 = vpop.permute.xlu0 %1226
        %1230 = vset.pattern.permute.xlu0 0
        %1231 = vperm.xlu0 %1230, %v1153
        %v1232 = vpop.permute.xlu0 %1231
        %v1234 = vadd.f32 %v1106, %v1157
        %v1235 = vadd.f32 %v1107, %v1157
        %v1236 = vadd.f32 %v1108, %v1162
        %v1237 = vadd.f32 %v1109, %v1162
        %v1238 = vadd.f32 %v1110, %v1167
        %v1239 = vadd.f32 %v1111, %v1167
        %v1240 = vadd.f32 %v1112, %v1172
        %v1241 = vadd.f32 %v1113, %v1172
        %v1242 = vadd.f32 %v1114, %v1177
        %v1243 = vadd.f32 %v1115, %v1177
        %v1244 = vadd.f32 %v1116, %v1182
        %v1245 = vadd.f32 %v1117, %v1182
        %v1246 = vadd.f32 %v1118, %v1187
        %v1247 = vadd.f32 %v1119, %v1187
        %v1248 = vadd.f32 %v1120, %v1192
        %v1249 = vadd.f32 %v1121, %v1192
        %v1250 = vadd.f32 %v1122, %v1197
        %v1251 = vadd.f32 %v1123, %v1197
        %v1252 = vadd.f32 %v1124, %v1202
        %v1253 = vadd.f32 %v1125, %v1202
        %v1254 = vadd.f32 %v1126, %v1207
        %v1255 = vadd.f32 %v1127, %v1207
        %v1256 = vadd.f32 %v1128, %v1212
        %v1257 = vadd.f32 %v1129, %v1212
        %v1258 = vadd.f32 %v1130, %v1217
        %v1259 = vadd.f32 %v1131, %v1217
        %v1260 = vadd.f32 %v1132, %v1222
        %v1261 = vadd.f32 %v1133, %v1222
        %v1262 = vadd.f32 %v1134, %v1227
        %v1263 = vadd.f32 %v1135, %v1227
        %v1264 = vadd.f32 %v1136, %v1232
        %v1265 = vadd.f32 %v1137, %v1232
        %v1266 = vpack.c.bf16 %v1236, %v1234
        %v1267 = vpack.c.bf16 %v1237, %v1235
        %v1268 = vpack.c.bf16 %v1240, %v1238
        %v1269 = vpack.c.bf16 %v1241, %v1239
        %v1270 = vpack.c.bf16 %v1244, %v1242
        %v1271 = vpack.c.bf16 %v1245, %v1243
        %v1272 = vpack.c.bf16 %v1248, %v1246
        %v1273 = vpack.c.bf16 %v1249, %v1247
        %v1274 = vpack.c.bf16 %v1252, %v1250
        %v1275 = vpack.c.bf16 %v1253, %v1251
        %v1276 = vpack.c.bf16 %v1256, %v1254
        %v1277 = vpack.c.bf16 %v1257, %v1255
        %v1278 = vpack.c.bf16 %v1260, %v1258
        %v1279 = vpack.c.bf16 %v1261, %v1259
        %v1280 = vpack.c.bf16 %v1264, %v1262
        %v1281 = vpack.c.bf16 %v1265, %v1263
        %v1282 = vld [vmem:[%s4] sm:$0xf]
        %v1283 = vld [vmem:[%s4 + $0x4] sm:$0xf]
        %v1284 = vld [vmem:[%s4 + $0x8] sm:$0xf]
        %v1285 = vld [vmem:[%s4 + $0xc] sm:$0xf]
        %v1286 = vld [vmem:[%s4 + $0x10] sm:$0xf]
        %v1287 = vld [vmem:[%s4 + $0x14] sm:$0xf]
        %v1288 = vld [vmem:[%s4 + $0x18] sm:$0xf]
        %v1289 = vld [vmem:[%s4 + $0x1c] sm:$0xf]
        %v1290 = vld [vmem:[%s4 + $0x20] sm:$0xf]
        %v1291 = vld [vmem:[%s4 + $0x24] sm:$0xf]
        %v1292 = vld [vmem:[%s4 + $0x28] sm:$0xf]
        %v1293 = vld [vmem:[%s4 + $0x2c] sm:$0xf]
        %v1294 = vld [vmem:[%s4 + $0x30] sm:$0xf]
        %v1295 = vld [vmem:[%s4 + $0x34] sm:$0xf]
        %v1296 = vld [vmem:[%s4 + $0x38] sm:$0xf]
        %v1297 = vld [vmem:[%s4 + $0x3c] sm:$0xf]
        %v1298 = vld [vmem:[%s5] sm:$0x1]
        %v1300 = vlaneseq
        %v1301 = vshrl.u32 %v1300, 7
        %v1302 = vsub.s32 0, %v1301
        %v1303 = vrot.slane %v1298, %v1302
        %1305 = vxpose.xlu0.c.b16.start [1/8] %v1266, 128
        %1306 = vxpose.xlu0.c.b16.cont [2/8] %v1268, 128
        %1307 = vxpose.xlu0.c.b16.cont [3/8] %v1270, 128
        %1308 = vxpose.xlu0.c.b16.cont [4/8] %v1272, 128
        %1309 = vxpose.xlu0.c.b16.cont [5/8] %v1274, 128
        %1310 = vxpose.xlu0.c.b16.cont [6/8] %v1276, 128
        %1311 = vxpose.xlu0.c.b16.cont [7/8] %v1278, 128
        %1312 = vxpose.xlu0.c.b16.end [8/8] %v1280, 128
        %v1313 = vpop.trf.xlu0
        %v1314 = vpop.trf.xlu0
        %v1315 = vpop.trf.xlu0
        %v1316 = vpop.trf.xlu0
        %v1317 = vpop.trf.xlu0
        %v1318 = vpop.trf.xlu0
        %v1319 = vpop.trf.xlu0
        %v1320 = vpop.trf.xlu0
        %1321 = vxpose.xlu0.c.b16.start [1/8] %v1267, 128
        %1322 = vxpose.xlu0.c.b16.cont [2/8] %v1269, 128
        %1323 = vxpose.xlu0.c.b16.cont [3/8] %v1271, 128
        %1324 = vxpose.xlu0.c.b16.cont [4/8] %v1273, 128
        %1325 = vxpose.xlu0.c.b16.cont [5/8] %v1275, 128
        %1326 = vxpose.xlu0.c.b16.cont [6/8] %v1277, 128
        %1327 = vxpose.xlu0.c.b16.cont [7/8] %v1279, 128
        %1328 = vxpose.xlu0.c.b16.end [8/8] %v1281, 128
        %v1329 = vpop.trf.xlu0
        %v1330 = vpop.trf.xlu0
        %v1331 = vpop.trf.xlu0
        %v1332 = vpop.trf.xlu0
        %v1333 = vpop.trf.xlu0
        %v1334 = vpop.trf.xlu0
        %v1335 = vpop.trf.xlu0
        %v1336 = vpop.trf.xlu0
        %v1353 = vunpack.c.l.b16 %v1282
        %v1354 = vunpack.c.l.b16 %v1283
        %v1355 = vunpack.c.l.b16 %v1284
        %v1356 = vunpack.c.l.b16 %v1285
        %v1357 = vunpack.c.l.b16 %v1286
        %v1358 = vunpack.c.l.b16 %v1287
        %v1359 = vunpack.c.l.b16 %v1288
        %v1360 = vunpack.c.l.b16 %v1289
        %v1361 = vunpack.c.l.b16 %v1290
        %v1362 = vunpack.c.l.b16 %v1291
        %v1363 = vunpack.c.l.b16 %v1292
        %v1364 = vunpack.c.l.b16 %v1293
        %v1365 = vunpack.c.l.b16 %v1294
        %v1366 = vunpack.c.l.b16 %v1295
        %v1367 = vunpack.c.l.b16 %v1296
        %v1368 = vunpack.c.l.b16 %v1297
        %v1369 = vpack.c.b16 %v1354, %v1353
        %v1370 = vpack.c.b16 %v1356, %v1355
        %v1371 = vpack.c.b16 %v1358, %v1357
        %v1372 = vpack.c.b16 %v1360, %v1359
        %v1373 = vpack.c.b16 %v1362, %v1361
        %v1374 = vpack.c.b16 %v1364, %v1363
        %v1375 = vpack.c.b16 %v1366, %v1365
        %v1376 = vpack.c.b16 %v1368, %v1367
        %1385 = vmatprep.subr.bf16.mxu0 0
        %1386 = vmatpush1.bf16.msra.mxu0 %v1369
        %1387 = vmatprep.subr.bf16.mxu0 0
        %1388 = vmatpush1.bf16.msra.mxu0 %v1370
        %1389 = vmatprep.subr.bf16.mxu0 0
        %1390 = vmatpush1.bf16.msra.mxu0 %v1371
        %1391 = vmatprep.subr.bf16.mxu0 0
        %1392 = vmatpush1.bf16.msra.mxu0 %v1372
        %1393 = vmatprep.subr.bf16.mxu0 0
        %1394 = vmatpush1.bf16.msra.mxu0 %v1373
        %1395 = vmatprep.subr.bf16.mxu0 0
        %1396 = vmatpush1.bf16.msra.mxu0 %v1374
        %1397 = vmatprep.subr.bf16.mxu0 0
        %1398 = vmatpush1.bf16.msra.mxu0 %v1375
        %1399 = vmatprep.subr.bf16.mxu0 0
        %1400 = vmatpush1.bf16.msra.mxu0 %v1376
        %1401 = vmatprep.subr.bf16.mxu0 0
        %1402 = vmatpush1.bf16.msra.mxu0 0
        %1403 = vmatprep.subr.bf16.mxu0 0
        %1404 = vmatpush1.bf16.msra.mxu0 0
        %1405 = vmatprep.subr.bf16.mxu0 0
        %1406 = vmatpush1.bf16.msra.mxu0 0
        %1407 = vmatprep.subr.bf16.mxu0 0
        %1408 = vmatpush1.bf16.msra.mxu0 0
        %1409 = vmatprep.subr.bf16.mxu0 0
        %1410 = vmatpush1.bf16.msra.mxu0 0
        %1411 = vmatprep.subr.bf16.mxu0 0
        %1412 = vmatpush1.bf16.msra.mxu0 0
        %1413 = vmatprep.subr.bf16.mxu0 0
        %1414 = vmatpush1.bf16.msra.mxu0 0
        %1415 = vmatprep.subr.bf16.mxu0 0
        %1416 = vmatpush1.bf16.msra.mxu0 0
        %1417 = vmatprep.mubr.bf16.mxu0 0
        %1418 = vmatmul.mubr.bf16.gmra.mrb[0].mxu0 %v1313
        %v1419 = vpop.f32.mrb[0].mxu0
        %v1420 = vadd.f32 %v1303, %v1419
        %v1421 = vpop.f32.mrb[0].mxu0
        %v1422 = vpop.f32.mrb[0].mxu0
        %v1423 = vadd.f32 %v1303, %v1422
        %v1424 = vpop.f32.mrb[0].mxu0
        %1425 = vmatprep.mubr.bf16.mxu0 0
        %1426 = vmatmul.mubr.bf16.gmra.mrb[0].mxu0 %v1314
        %v1427 = vpop.f32.mrb[0].mxu0
        %v1428 = vadd.f32 %v1303, %v1427
        %v1429 = vpop.f32.mrb[0].mxu0
        %v1430 = vpop.f32.mrb[0].mxu0
        %v1431 = vadd.f32 %v1303, %v1430
        %v1432 = vpop.f32.mrb[0].mxu0
        %1433 = vmatprep.mubr.bf16.mxu0 0
        %1434 = vmatmul.mubr.bf16.gmra.mrb[0].mxu0 %v1315
        %v1435 = vpop.f32.mrb[0].mxu0
        %v1436 = vadd.f32 %v1303, %v1435
        %v1437 = vpop.f32.mrb[0].mxu0
        %v1438 = vpop.f32.mrb[0].mxu0
        %v1439 = vadd.f32 %v1303, %v1438
        %v1440 = vpop.f32.mrb[0].mxu0
        %1441 = vmatprep.mubr.bf16.mxu0 0
        %1442 = vmatmul.mubr.bf16.gmra.mrb[0].mxu0 %v1316
        %v1443 = vpop.f32.mrb[0].mxu0
        %v1444 = vadd.f32 %v1303, %v1443
        %v1445 = vpop.f32.mrb[0].mxu0
        %v1446 = vpop.f32.mrb[0].mxu0
        %v1447 = vadd.f32 %v1303, %v1446
        %v1448 = vpop.f32.mrb[0].mxu0
        %1449 = vmatprep.mubr.bf16.mxu0 0
        %1450 = vmatmul.mubr.bf16.gmra.mrb[0].mxu0 %v1317
        %v1451 = vpop.f32.mrb[0].mxu0
        %v1452 = vadd.f32 %v1303, %v1451
        %v1453 = vpop.f32.mrb[0].mxu0
        %v1454 = vpop.f32.mrb[0].mxu0
        %v1455 = vadd.f32 %v1303, %v1454
        %v1456 = vpop.f32.mrb[0].mxu0
        %1457 = vmatprep.mubr.bf16.mxu0 0
        %1458 = vmatmul.mubr.bf16.gmra.mrb[0].mxu0 %v1318
        %v1459 = vpop.f32.mrb[0].mxu0
        %v1460 = vadd.f32 %v1303, %v1459
        %v1461 = vpop.f32.mrb[0].mxu0
        %v1462 = vpop.f32.mrb[0].mxu0
        %v1463 = vadd.f32 %v1303, %v1462
        %v1464 = vpop.f32.mrb[0].mxu0
        %1465 = vmatprep.mubr.bf16.mxu0 0
        %1466 = vmatmul.mubr.bf16.gmra.mrb[0].mxu0 %v1319
        %v1467 = vpop.f32.mrb[0].mxu0
        %v1468 = vadd.f32 %v1303, %v1467
        %v1469 = vpop.f32.mrb[0].mxu0
        %v1470 = vpop.f32.mrb[0].mxu0
        %v1471 = vadd.f32 %v1303, %v1470
        %v1472 = vpop.f32.mrb[0].mxu0
        %1473 = vmatprep.mubr.bf16.mxu0 0
        %1474 = vmatmul.mubr.bf16.gmra.mrb[0].mxu0 %v1320
        %v1475 = vpop.f32.mrb[0].mxu0
        %v1476 = vadd.f32 %v1303, %v1475
        %v1477 = vpop.f32.mrb[0].mxu0
        %v1478 = vpop.f32.mrb[0].mxu0
        %v1479 = vadd.f32 %v1303, %v1478
        %v1480 = vpop.f32.mrb[0].mxu0
        %1481 = vmatprep.mubr.bf16.mxu0 0
        %1482 = vmatmul.mubr.bf16.gmra.mrb[0].mxu0 %v1329
        %v1483 = vpop.f32.mrb[0].mxu0
        %v1484 = vadd.f32 %v1303, %v1483
        %v1485 = vpop.f32.mrb[0].mxu0
        %v1486 = vpop.f32.mrb[0].mxu0
        %v1487 = vadd.f32 %v1303, %v1486
        %v1488 = vpop.f32.mrb[0].mxu0
        %1489 = vmatprep.mubr.bf16.mxu0 0
        %1490 = vmatmul.mubr.bf16.gmra.mrb[0].mxu0 %v1330
        %v1491 = vpop.f32.mrb[0].mxu0
        %v1492 = vadd.f32 %v1303, %v1491
        %v1493 = vpop.f32.mrb[0].mxu0
        %v1494 = vpop.f32.mrb[0].mxu0
        %v1495 = vadd.f32 %v1303, %v1494
        %v1496 = vpop.f32.mrb[0].mxu0
        %1497 = vmatprep.mubr.bf16.mxu0 0
        %1498 = vmatmul.mubr.bf16.gmra.mrb[0].mxu0 %v1331
        %v1499 = vpop.f32.mrb[0].mxu0
        %v1500 = vadd.f32 %v1303, %v1499
        %v1501 = vpop.f32.mrb[0].mxu0
        %v1502 = vpop.f32.mrb[0].mxu0
        %v1503 = vadd.f32 %v1303, %v1502
        %v1504 = vpop.f32.mrb[0].mxu0
        %1505 = vmatprep.mubr.bf16.mxu0 0
        %1506 = vmatmul.mubr.bf16.gmra.mrb[0].mxu0 %v1332
        %v1507 = vpop.f32.mrb[0].mxu0
        %v1508 = vadd.f32 %v1303, %v1507
        %v1509 = vpop.f32.mrb[0].mxu0
        %v1510 = vpop.f32.mrb[0].mxu0
        %v1511 = vadd.f32 %v1303, %v1510
        %v1512 = vpop.f32.mrb[0].mxu0
        %1513 = vmatprep.mubr.bf16.mxu0 0
        %1514 = vmatmul.mubr.bf16.gmra.mrb[0].mxu0 %v1333
        %v1515 = vpop.f32.mrb[0].mxu0
        %v1516 = vadd.f32 %v1303, %v1515
        %v1517 = vpop.f32.mrb[0].mxu0
        %v1518 = vpop.f32.mrb[0].mxu0
        %v1519 = vadd.f32 %v1303, %v1518
        %v1520 = vpop.f32.mrb[0].mxu0
        %1521 = vmatprep.mubr.bf16.mxu0 0
        %1522 = vmatmul.mubr.bf16.gmra.mrb[0].mxu0 %v1334
        %v1523 = vpop.f32.mrb[0].mxu0
        %v1524 = vadd.f32 %v1303, %v1523
        %v1525 = vpop.f32.mrb[0].mxu0
        %v1526 = vpop.f32.mrb[0].mxu0
        %v1527 = vadd.f32 %v1303, %v1526
        %v1528 = vpop.f32.mrb[0].mxu0
        %1529 = vmatprep.mubr.bf16.mxu0 0
        %1530 = vmatmul.mubr.bf16.gmra.mrb[0].mxu0 %v1335
        %v1531 = vpop.f32.mrb[0].mxu0
        %v1532 = vadd.f32 %v1303, %v1531
        %v1533 = vpop.f32.mrb[0].mxu0
        %v1534 = vpop.f32.mrb[0].mxu0
        %v1535 = vadd.f32 %v1303, %v1534
        %v1536 = vpop.f32.mrb[0].mxu0
        %1537 = vmatprep.mubr.bf16.mxu0 0
        %1538 = vmatmul.mubr.bf16.gmra.mrb[0].mxu0 %v1336
        %v1539 = vpop.f32.mrb[0].mxu0
        %v1540 = vadd.f32 %v1303, %v1539
        %v1541 = vpop.f32.mrb[0].mxu0
        %v1542 = vpop.f32.mrb[0].mxu0
        %v1543 = vadd.f32 %v1303, %v1542
        %v1544 = vpop.f32.mrb[0].mxu0
        %1545 = vdwg.mxu0
        %1546 = vst [vmem:[%s269] sm:$0xff] %v1420
        %1547 = vst [vmem:[%s269 + $0x8] sm:$0xff] %v1423
        %1548 = vst [vmem:[%s269 + $0x10] sm:$0xff] %v1428
        %1549 = vst [vmem:[%s269 + $0x18] sm:$0xff] %v1431
        %1550 = vst [vmem:[%s269 + $0x20] sm:$0xff] %v1436
        %1551 = vst [vmem:[%s269 + $0x28] sm:$0xff] %v1439
        %1552 = vst [vmem:[%s269 + $0x30] sm:$0xff] %v1444
        %1553 = vst [vmem:[%s269 + $0x38] sm:$0xff] %v1447
        %1554 = vst [vmem:[%s269 + $0x40] sm:$0xff] %v1452
        %1555 = vst [vmem:[%s269 + $0x48] sm:$0xff] %v1455
        %1556 = vst [vmem:[%s269 + $0x50] sm:$0xff] %v1460
        %1557 = vst [vmem:[%s269 + $0x58] sm:$0xff] %v1463
        %1558 = vst [vmem:[%s269 + $0x60] sm:$0xff] %v1468
        %1559 = vst [vmem:[%s269 + $0x68] sm:$0xff] %v1471
        %1560 = vst [vmem:[%s269 + $0x70] sm:$0xff] %v1476
        %1561 = vst [vmem:[%s269 + $0x78] sm:$0xff] %v1479
        %1562 = vst [vmem:[%s269 + $0x80] sm:$0xff] %v1484
        %1563 = vst [vmem:[%s269 + $0x88] sm:$0xff] %v1487
        %1564 = vst [vmem:[%s269 + $0x90] sm:$0xff] %v1492
        %1565 = vst [vmem:[%s269 + $0x98] sm:$0xff] %v1495
        %1566 = vst [vmem:[%s269 + $0xa0] sm:$0xff] %v1500
        %1567 = vst [vmem:[%s269 + $0xa8] sm:$0xff] %v1503
        %1568 = vst [vmem:[%s269 + $0xb0] sm:$0xff] %v1508
        %1569 = vst [vmem:[%s269 + $0xb8] sm:$0xff] %v1511
        %1570 = vst [vmem:[%s269 + $0xc0] sm:$0xff] %v1516
        %1571 = vst [vmem:[%s269 + $0xc8] sm:$0xff] %v1519
        %1572 = vst [vmem:[%s269 + $0xd0] sm:$0xff] %v1524
        %1573 = vst [vmem:[%s269 + $0xd8] sm:$0xff] %v1527
        %1574 = vst [vmem:[%s269 + $0xe0] sm:$0xff] %v1532
        %1575 = vst [vmem:[%s269 + $0xe8] sm:$0xff] %v1535
        %1576 = vst [vmem:[%s269 + $0xf0] sm:$0xff] %v1540
        %1577 = vst [vmem:[%s269 + $0xf8] sm:$0xff] %v1543
        %s1578 = sand.u32 %s162, 1
        %s1579 = scalar_lea.sflag [#allocation4], %s1578
        %s1580 = sand.u32 %s162, 1
        %s1581 = smul.addr %s1580, 256
        %s1582 = scalar_lea.vmem [#allocation5], %s1581
        // Predicated region
        $region49: #{tpu_custom_call.1} parent=43 // pred_check
          %p1583 = pneg %p172
        $region50: #{tpu_custom_call.1} parent=43 // pred_check_branch
          %1585 = sbr.rel (%p1583) target = $region52
        $region51: #{tpu_custom_call.1} parent=43 // pred_region
          %s1587 = ssub.s32 4096, 4096
          %1588 = vsyncadd %s1579, %s1587
          %s1589 = smul.addr %s23, 32
          %s1590 = smul.addr %s1589, 128
          %s1591 = scalar_lea.hbm %s6, %s1590
          %s1592 = sshll.u32 %s1582, 4
          %s1593 = int_to_ptr.vmem [resolvable:$true] %s1592
          %1598 = dma.vmem_to_hbm [thread:$0]  %s1593, 4096, %s1591, %s1579, 128, 128, 8
        $region52: #{tpu_custom_call.1} parent=43 // pred_fallthru
          _
      $region44: #{tpu_custom_call.1} parent=5 // pred_fallthru
        _
      %p1599 = scmp.le.s32.totalorder 2, %s18
      // Predicated region
      $region53: #{tpu_custom_call.1} parent=5 // pred_check
        %p1600 = pneg %p1599
      $region54: #{tpu_custom_call.1} parent=5 // pred_check_branch
        %1602 = sbr.rel (%p1600) target = $region56
      $region55: #{tpu_custom_call.1} parent=5 // pred_region
        %s1603 = ssub.s32 %s18, 2
        // Predicated region
        $region57: #{tpu_custom_call.1} parent=55 // pred_check
          %p1604 = pneg %p178
        $region58: #{tpu_custom_call.1} parent=55 // pred_check_branch
          %1606 = sbr.rel (%p1604) target = $region60
        $region59: #{tpu_custom_call.1} parent=55 // pred_region
          %s1607 = sand.u32 %s163, 1
          %s1608 = scalar_lea.sflag [#allocation4], %s1607
          %s1609 = sand.u32 %s163, 1
          %s1610 = smul.addr %s1609, 256
          %s1611 = scalar_lea.vmem [#allocation5], %s1610
          %1612 = dma.done %s1608, 4096
        $region60: #{tpu_custom_call.1} parent=55 // pred_fallthru
          _
      $region56: #{tpu_custom_call.1} parent=5 // pred_fallthru
        _
    $region6: #{tpu_custom_call.1} parent=1 // loop_footer
      %s22 = sadd.s32 1, %s18
    $region7: #{tpu_custom_call.1} parent=1 // loop_footer_branch
      %17 = sbr.rel target = $region3
    $region8: #{tpu_custom_call.1} parent=1 // loop_exit
      _
    %1613 = vsyncpa [#allocation3], 1
    %s1614 = scalar_lea.sflag [#allocation3], 1
    %1615 = vsyncpa %s1614, 1
    %1616 = vsyncpa [#allocation4], 1
    %s1617 = scalar_lea.sflag [#allocation4], 1
    %1618 = vsyncpa %s1617, 1

</llo_original>
